<compile_context>
chip_gen: v5e
topology: v5e:2x2
jax: 0.10.0
libtpu: 0.0.40
codegen_flags: <defaults>
</compile_context>

<pallas_src>
import numpy as np
import jax
import jax.numpy as jnp
from jax.experimental import pallas as pl
from jax.experimental.pallas import tpu as pltpu

TILE_B = 512  # samples per grid step; multiple of 256 to fill the v6e/v7x MXU


def scor_kernel(uidx_ref, iidx_ref, ui_ref, w_ref, b_ref, out_ref):
    # uidx_ref : (1, TILE_B) int32 user indices for this tile (VMEM)
    # iidx_ref : (1, TILE_B) int32 item indices, pre-shifted by NU_pad (VMEM)
    # ui_ref   : (F_pad, NU_pad + NI_pad) fused signed table [U^T, -I^T] (VMEM, resident)
    # w_ref/b_ref : (1, 1) Linear(1,1) scalars (SMEM)
    # out_ref  : (1, TILE_B) ratings row
    uidx = uidx_ref[...]
    iidx = iidx_ref[...]
    tile_b = uidx.shape[1]
    n_rows = ui_ref.shape[1]

    # One fused 0/1 selection matrix: +1 at row uidx (user half) and +1 at row
    # NU_pad + iidx (item half).  The item half of ui_ref already carries the
    # minus sign, so a single MXU matmul produces diff = u - i directly.
    rows = jax.lax.broadcasted_iota(jnp.int32, (n_rows, tile_b), 0)
    sel = ((rows == uidx) | (rows == iidx)).astype(jnp.float32)

    # (F_pad, n_rows) @ (n_rows, TILE_B) -> (F_pad, TILE_B) on the MXU.
    diff = jnp.dot(ui_ref[...], sel, preferred_element_type=jnp.float32)

    # L2 over the factor (sublane) axis -> lane-dense (1, TILE_B) row (XLU).
    d2 = jnp.sum(diff * diff, axis=0, keepdims=True)
    p2 = jnp.sqrt(d2)

    # Linear(1, 1): scalar weight/bias read once per tile, applied to the row.
    out_ref[...] = p2 * w_ref[0, 0] + b_ref[0, 0]


def _round_up(x, mult):
    return -(-x // mult) * mult


def _vmem_limit_bytes():
    """~75% of per-core VMEM: ~48 MiB on v7x, ~96 MiB on v5e/v6e."""
    cap = 64 * 1024 * 1024  # conservative fallback, safe on all generations
    try:
        info = pltpu.get_tpu_info()
        cap_attr = getattr(info, "vmem_capacity_bytes", None)
        if cap_attr:
            cap = int(cap_attr)
    except Exception:
        pass
    return int(cap * 3 // 4)


def _prep_fused_table(user_emb, item_emb):
    """Zero-pad both tables to (8,128)-aligned shapes, transpose, and fuse as
    [U^T, -I^T] along the row/lane axis.  Returns (ui_t, nu_pad)."""
    nu, f = user_emb.shape
    ni, f2 = item_emb.shape
    assert f == f2, "user/item factor dims must match"
    f_pad = _round_up(f, 8)      # factors -> sublane axis after transpose
    nu_pad = _round_up(nu, 128)  # rows -> lane axis after transpose
    ni_pad = _round_up(ni, 128)
    u = jnp.pad(user_emb.astype(jnp.float32), ((0, nu_pad - nu), (0, f_pad - f)))
    i = jnp.pad(item_emb.astype(jnp.float32), ((0, ni_pad - ni), (0, f_pad - f)))
    ui_t = jnp.concatenate([u.T, -i.T], axis=1)   # (F_pad, NU_pad + NI_pad)
    return ui_t, nu_pad


def _prep_indices(idx, b_pad, tile_b, offset=0):
    idx = idx.astype(jnp.int32)
    # Padded batch entries select row `offset` (a valid row of the respective
    # table half); their outputs are sliced away in the wrapper.
    idx = jnp.pad(idx, (0, b_pad - idx.shape[0])) + offset
    return idx.reshape(b_pad // tile_b, tile_b)


def scor_forward(user_idx, item_idx, user_emb, item_emb, w, b, *, tile_b=TILE_B):
    B = user_idx.shape[0]
    num_tiles = pl.cdiv(B, tile_b)
    b_pad = num_tiles * tile_b

    ui_t, nu_pad = _prep_fused_table(user_emb, item_emb)
    uidx = _prep_indices(user_idx, b_pad, tile_b, offset=0)       # (num_tiles, tile_b)
    iidx = _prep_indices(item_idx, b_pad, tile_b, offset=nu_pad)  # shifted into item half
    w = jnp.asarray(w, jnp.float32).reshape(1, 1)
    b = jnp.asarray(b, jnp.float32).reshape(1, 1)

    def build(resident_table):
        if resident_table:
            # Unblocked VMEM operand: copied HBM->VMEM once, not double-buffered.
            table_spec = pl.BlockSpec(memory_space=pltpu.MemorySpace.VMEM)
        else:
            # Fallback: full-extent pipelined block (2 buffers, always supported).
            table_spec = pl.BlockSpec(ui_t.shape, lambda t: (0, 0))
        return pl.pallas_call(
            scor_kernel,
            out_shape=jax.ShapeDtypeStruct((num_tiles, tile_b), jnp.float32),
            grid=(num_tiles,),
            in_specs=[
                pl.BlockSpec((1, tile_b), lambda t: (t, 0)),        # user index row
                pl.BlockSpec((1, tile_b), lambda t: (t, 0)),        # item index row (shifted)
                table_spec,                                         # fused signed table
                pl.BlockSpec(memory_space=pltpu.MemorySpace.SMEM),  # Linear weight
                pl.BlockSpec(memory_space=pltpu.MemorySpace.SMEM),  # Linear bias
            ],
            # lane-dense (1, tile_b) output row per grid step -> unmasked stores
            out_specs=pl.BlockSpec((1, tile_b), lambda t: (t, 0)),
            compiler_params=pltpu.CompilerParams(
                dimension_semantics=("parallel",),     # shard batch tiles across TCs
                vmem_limit_bytes=_vmem_limit_bytes(),  # generation-aware budget
            ),
        )

    try:
        out = build(resident_table=True)(uidx, iidx, ui_t, w, b)
    except Exception:
        out = build(resident_table=False)(uidx, iidx, ui_t, w, b)

    # (num_tiles, tile_b) -> (B,)   (matches .view(-1); drops padded samples)
    return out.reshape(-1)[:B]


if __name__ == "__main__":
    # Small, deterministic setup consistent with SCoR.__init__
    n_users, n_items, n_factors = 10, 12, 32
    B = 8

    # Embedding init mirrors the module: 0.1 * RandomState(1).rand(...)
    rs = np.random.RandomState(1)
    user_emb = jnp.asarray(0.1 * rs.rand(n_users, n_factors), dtype=jnp.float32)
    item_emb = jnp.asarray(0.1 * rs.rand(n_items, n_factors), dtype=jnp.float32)

    # Linear(1,1) params (deterministic synthetic values; no checkpoint load)
    w = jnp.full((1, 1), 0.3, dtype=jnp.float32)
    b = jnp.full((1, 1), -0.1, dtype=jnp.float32)

    key = jax.random.PRNGKey(0)
    ku, ki = jax.random.split(key)
    user_idx = jax.random.randint(ku, (B,), 0, n_users, dtype=jnp.int32)
    item_idx = jax.random.randint(ki, (B,), 0, n_items, dtype=jnp.int32)

    rating = scor_forward(user_idx, item_idx, user_emb, item_emb, w, b)
    rating = jax.block_until_ready(rating)

    # Pure-JAX reference for correctness
    u_src = user_emb[user_idx]
    i_src = item_emb[item_idx]
    p2_ref = jnp.sqrt(jnp.sum((u_src - i_src) ** 2, axis=1))
    ref = p2_ref * w[0, 0] + b[0, 0]

    assert rating.shape == (B,)
    np.testing.assert_allclose(np.asarray(rating), np.asarray(ref),
                               rtol=1e-5, atol=1e-6)
    print("KERNEL_OK")
</pallas_src>

<mosaic_0001>
module attributes {stable_mosaic.version = 11 : i64} {
  func.func @scor_kernel(%arg0: i32, %arg1: memref<1x512xi32, #tpu.memory_space<vmem>>, %arg2: memref<1x512xi32, #tpu.memory_space<vmem>>, %arg3: memref<32x256xf32, #tpu.memory_space<vmem>>, %arg4: memref<1x1xf32, #tpu.memory_space<smem>>, %arg5: memref<1x1xf32, #tpu.memory_space<smem>>, %arg6: memref<1x512xf32, #tpu.memory_space<vmem>>) attributes {dimension_semantics = [#tpu.dimension_semantics<parallel>], iteration_bounds = array<i64: 1>, scalar_prefetch = 0 : i64, scratch_operands = 0 : i64, tpu.core_type = #tpu.core_type<tc>, window_params = [{transform_indices = @transform_0, window_bounds = array<i64: 1, 512>}, {transform_indices = @transform_1, window_bounds = array<i64: 1, 512>}, {pipeline_mode = #tpu.pipeline_mode<synchronous>, transform_indices = @transform_2, window_bounds = array<i64: 32, 256>}, {transform_indices = @transform_3, window_bounds = array<i64: 1, 1>}, {transform_indices = @transform_4, window_bounds = array<i64: 1, 1>}, {transform_indices = @transform_5, window_bounds = array<i64: 1, 512>}]} {
    %c0 = arith.constant 0 : index
    %c0_0 = arith.constant 0 : index
    %0 = vector.load %arg1[%c0, %c0_0] : memref<1x512xi32, #tpu.memory_space<vmem>>, vector<1x512xi32>
    %c0_1 = arith.constant 0 : index
    %c0_2 = arith.constant 0 : index
    %1 = vector.load %arg2[%c0_1, %c0_2] : memref<1x512xi32, #tpu.memory_space<vmem>>, vector<1x512xi32>
    %2 = tpu.iota {dimensions = array<i32: 0>} : vector<256x512xi32>
    %3 = vector.broadcast %0 : vector<1x512xi32> to vector<256x512xi32>
    %4 = arith.cmpi eq, %2, %3 : vector<256x512xi32>
    %5 = vector.broadcast %1 : vector<1x512xi32> to vector<256x512xi32>
    %6 = arith.cmpi eq, %2, %5 : vector<256x512xi32>
    %7 = arith.ori %4, %6 : vector<256x512xi1>
    %8 = arith.extui %7 : vector<256x512xi1> to vector<256x512xi32>
    %9 = arith.sitofp %8 : vector<256x512xi32> to vector<256x512xf32>
    %c0_3 = arith.constant 0 : index
    %c0_4 = arith.constant 0 : index
    %10 = vector.load %arg3[%c0_3, %c0_4] : memref<32x256xf32, #tpu.memory_space<vmem>>, vector<32x256xf32>
    %cst = arith.constant dense<0.000000e+00> : vector<32x512xf32>
    %11 = tpu.matmul %10, %9, %cst {dimension_numbers = #tpu.dot_dimension_numbers<[1], [0], [0], [1], [0, 0, 1, 1], [], []>} : vector<32x256xf32>, vector<256x512xf32>, vector<32x512xf32> -> vector<32x512xf32>
    %12 = arith.mulf %11, %11 : vector<32x512xf32>
    %cst_5 = arith.constant dense<0.000000e+00> : vector<512xf32>
    %13 = vector.multi_reduction <add>, %12, %cst_5 [0] : vector<32x512xf32> to vector<512xf32>
    %14 = vector.shape_cast %13 : vector<512xf32> to vector<1x512xf32>
    %15 = math.sqrt %14 : vector<1x512xf32>
    %c0_6 = arith.constant 0 : index
    %c0_7 = arith.constant 0 : index
    %16 = memref.load %arg4[%c0_6, %c0_7] : memref<1x1xf32, #tpu.memory_space<smem>>
    %17 = vector.broadcast %16 : f32 to vector<1x512xf32>
    %18 = arith.mulf %15, %17 : vector<1x512xf32>
    %c0_8 = arith.constant 0 : index
    %c0_9 = arith.constant 0 : index
    %19 = memref.load %arg5[%c0_8, %c0_9] : memref<1x1xf32, #tpu.memory_space<smem>>
    %20 = vector.broadcast %19 : f32 to vector<1x512xf32>
    %21 = arith.addf %18, %20 : vector<1x512xf32>
    %c0_10 = arith.constant 0 : index
    %c0_11 = arith.constant 0 : index
    %22 = vector.load %arg6[%c0_10, %c0_11] : memref<1x512xf32, #tpu.memory_space<vmem>>, vector<1x512xf32>
    tpu.vector_store %arg6[%c0_10, %c0_11], %21 {strides = array<i32>} : memref<1x512xf32, #tpu.memory_space<vmem>>, vector<1x512xf32>,
    return
  }
  func.func @transform_0(%arg0: i32) -> (i32, i32) {
    %c0_i32 = arith.constant 0 : i32
    %c0_i32_0 = arith.constant 0 : i32
    return %arg0, %c0_i32 : i32, i32
  }
  func.func @transform_1(%arg0: i32) -> (i32, i32) {
    %c0_i32 = arith.constant 0 : i32
    %c0_i32_0 = arith.constant 0 : i32
    return %arg0, %c0_i32 : i32, i32
  }
  func.func @transform_2(%arg0: i32) -> (i32, i32) {
    %c0_i32 = arith.constant 0 : i32
    %c0_i32_0 = arith.constant 0 : i32
    %c0_i32_1 = arith.constant 0 : i32
    return %c0_i32, %c0_i32_0 : i32, i32
  }
  func.func @transform_3(%arg0: i32) -> (i32, i32) {
    %c0_i32 = arith.constant 0 : i32
    %c0_i32_0 = arith.constant 0 : i32
    %c0_i32_1 = arith.constant 0 : i32
    return %c0_i32, %c0_i32_0 : i32, i32
  }
  func.func @transform_4(%arg0: i32) -> (i32, i32) {
    %c0_i32 = arith.constant 0 : i32
    %c0_i32_0 = arith.constant 0 : i32
    %c0_i32_1 = arith.constant 0 : i32
    return %c0_i32, %c0_i32_0 : i32, i32
  }
  func.func @transform_5(%arg0: i32) -> (i32, i32) {
    %c0_i32 = arith.constant 0 : i32
    %c0_i32_0 = arith.constant 0 : i32
    return %arg0, %c0_i32 : i32, i32
  }
}

module attributes {stable_mosaic.version = 11 : i64} {
  func.func @scor_kernel(%arg0: i32, %arg1: memref<1x512xi32, #tpu.memory_space<vmem>>, %arg2: memref<1x512xi32, #tpu.memory_space<vmem>>, %arg3: memref<32x256xf32, #tpu.memory_space<vmem>>, %arg4: memref<1x1xf32, #tpu.memory_space<smem>>, %arg5: memref<1x1xf32, #tpu.memory_space<smem>>, %arg6: memref<1x512xf32, #tpu.memory_space<vmem>>) attributes {dimension_semantics = [#tpu.dimension_semantics<parallel>], iteration_bounds = array<i64: 1>, scalar_prefetch = 0 : i64, scratch_operands = 0 : i64, tpu.core_type = #tpu.core_type<tc>, window_params = [{transform_indices = @transform_0, window_bounds = array<i64: 1, 512>}, {transform_indices = @transform_1, window_bounds = array<i64: 1, 512>}, {pipeline_mode = #tpu.pipeline_mode<synchronous>, transform_indices = @transform_2, window_bounds = array<i64: 32, 256>}, {transform_indices = @transform_3, window_bounds = array<i64: 1, 1>}, {transform_indices = @transform_4, window_bounds = array<i64: 1, 1>}, {transform_indices = @transform_5, window_bounds = array<i64: 1, 512>}]} {
    %c0 = arith.constant 0 : index
    %c0_0 = arith.constant 0 : index
    %0 = vector.load %arg1[%c0, %c0_0] : memref<1x512xi32, #tpu.memory_space<vmem>>, vector<1x512xi32>
    %c0_1 = arith.constant 0 : index
    %c0_2 = arith.constant 0 : index
    %1 = vector.load %arg2[%c0_1, %c0_2] : memref<1x512xi32, #tpu.memory_space<vmem>>, vector<1x512xi32>
    %2 = tpu.iota {dimensions = array<i32: 0>} : vector<256x512xi32>
    %3 = vector.broadcast %0 : vector<1x512xi32> to vector<256x512xi32>
    %4 = arith.cmpi eq, %2, %3 : vector<256x512xi32>
    %5 = vector.broadcast %1 : vector<1x512xi32> to vector<256x512xi32>
    %6 = arith.cmpi eq, %2, %5 : vector<256x512xi32>
    %7 = arith.ori %4, %6 : vector<256x512xi1>
    %8 = arith.extui %7 : vector<256x512xi1> to vector<256x512xi32>
    %9 = arith.sitofp %8 : vector<256x512xi32> to vector<256x512xf32>
    %c0_3 = arith.constant 0 : index
    %c0_4 = arith.constant 0 : index
    %10 = vector.load %arg3[%c0_3, %c0_4] : memref<32x256xf32, #tpu.memory_space<vmem>>, vector<32x256xf32>
    %cst = arith.constant dense<0.000000e+00> : vector<32x512xf32>
    %11 = tpu.matmul %10, %9, %cst {dimension_numbers = #tpu.dot_dimension_numbers<[1], [0], [0], [1], [0, 0, 1, 1], [], []>} : vector<32x256xf32>, vector<256x512xf32>, vector<32x512xf32> -> vector<32x512xf32>
    %12 = arith.mulf %11, %11 : vector<32x512xf32>
    %cst_5 = arith.constant dense<0.000000e+00> : vector<512xf32>
    %13 = vector.multi_reduction <add>, %12, %cst_5 [0] : vector<32x512xf32> to vector<512xf32>
    %14 = vector.shape_cast %13 : vector<512xf32> to vector<1x512xf32>
    %15 = math.sqrt %14 : vector<1x512xf32>
    %c0_6 = arith.constant 0 : index
    %c0_7 = arith.constant 0 : index
    %16 = memref.load %arg4[%c0_6, %c0_7] : memref<1x1xf32, #tpu.memory_space<smem>>
    %17 = vector.broadcast %16 : f32 to vector<1x512xf32>
    %18 = arith.mulf %15, %17 : vector<1x512xf32>
    %c0_8 = arith.constant 0 : index
    %c0_9 = arith.constant 0 : index
    %19 = memref.load %arg5[%c0_8, %c0_9] : memref<1x1xf32, #tpu.memory_space<smem>>
    %20 = vector.broadcast %19 : f32 to vector<1x512xf32>
    %21 = arith.addf %18, %20 : vector<1x512xf32>
    %c0_10 = arith.constant 0 : index
    %c0_11 = arith.constant 0 : index
    %22 = vector.load %arg6[%c0_10, %c0_11] : memref<1x512xf32, #tpu.memory_space<vmem>>, vector<1x512xf32>
    tpu.vector_store %arg6[%c0_10, %c0_11], %21 {strides = array<i32>} : memref<1x512xf32, #tpu.memory_space<vmem>>, vector<1x512xf32>,
    return
  }
  func.func @transform_0(%arg0: i32) -> (i32, i32) {
    %c0_i32 = arith.constant 0 : i32
    %c0_i32_0 = arith.constant 0 : i32
    return %arg0, %c0_i32 : i32, i32
  }
  func.func @transform_1(%arg0: i32) -> (i32, i32) {
    %c0_i32 = arith.constant 0 : i32
    %c0_i32_0 = arith.constant 0 : i32
    return %arg0, %c0_i32 : i32, i32
  }
  func.func @transform_2(%arg0: i32) -> (i32, i32) {
    %c0_i32 = arith.constant 0 : i32
    %c0_i32_0 = arith.constant 0 : i32
    %c0_i32_1 = arith.constant 0 : i32
    return %c0_i32, %c0_i32_0 : i32, i32
  }
  func.func @transform_3(%arg0: i32) -> (i32, i32) {
    %c0_i32 = arith.constant 0 : i32
    %c0_i32_0 = arith.constant 0 : i32
    %c0_i32_1 = arith.constant 0 : i32
    return %c0_i32, %c0_i32_0 : i32, i32
  }
  func.func @transform_4(%arg0: i32) -> (i32, i32) {
    %c0_i32 = arith.constant 0 : i32
    %c0_i32_0 = arith.constant 0 : i32
    %c0_i32_1 = arith.constant 0 : i32
    return %c0_i32, %c0_i32_0 : i32, i32
  }
  func.func @transform_5(%arg0: i32) -> (i32, i32) {
    %c0_i32 = arith.constant 0 : i32
    %c0_i32_0 = arith.constant 0 : i32
    return %arg0, %c0_i32 : i32, i32
  }
}

</mosaic_0001>

<llo_original>
// kernel: tpu_custom_call.1
$region0: #{tpu_custom_call.1}
  #allocation0 [shape = 'u32[]', space=smem, size = 0x4, offset = 0x4, fixed_abs, tag = 'smem constant byte address 0x4 - core index']
  #allocation1 [shape = 'u32[72,128]{1,0:T(1,128)}', space=vmem, size = 0x9000, scoped, tag = 'internal scratch']
  #allocation2 [shape = 'f32[1,1]{1,0:T(1,128)S(6)}', space=smem, size = 0x200, scoped, tag = 'scoped memory for tpu_custom_call.1']
  #allocation3 [shape = 'f32[1,1]{1,0:T(1,128)S(6)}', space=smem, size = 0x200, scoped, tag = 'scoped memory for tpu_custom_call.1']
  %s0 = inlined_call_operand.vmem [shape: s32[1,512], index: 0, kind: input, shape index: {}]
  %s1 = inlined_call_operand.hbm [shape: s32[1,512], index: 1, kind: input, shape index: {}]
  %s2 = inlined_call_operand.hbm [shape: f32[32,256], index: 2, kind: input, shape index: {}]
  %s3 = inlined_call_operand.<no memory space> [shape: f32[1,1], index: 3, kind: input, shape index: {}]
  %s4 = inlined_call_operand.<no memory space> [shape: f32[1,1], index: 4, kind: input, shape index: {}]
  %s5 = inlined_call_operand.hbm [shape: f32[1,512], index: 5, kind: output, shape index: {}]
  %s6 = sld [smem:[#allocation0]]
  $region38: #{tpu_custom_call.1} parent=0
    _
  %s8 = ssub.s32 1, %s6
  %s9 = scalar_select 0, %s8, %s6
  %10 = sst [smem:[#allocation2]] %s3
  %11 = sst [smem:[#allocation3]] %s4
  $region1: #{tpu_custom_call.1} parent=0
    #allocation4 [shape = 'u8[2048]{0}', space=vmem, size = 0x800, scoped, tag = 'input window, operand 1, single buffered']
    #allocation5 [shape = 's32[1]{0}', space=sflag, size = 0x4, scoped, tag = 'scoped memory for tpu_custom_call.1']
    #allocation6 [shape = 's32[1]{0}', space=sflag, size = 0x4, scoped, tag = 'scoped memory for tpu_custom_call.1']
    #allocation7 [shape = 'u8[32768]{0}', space=vmem, size = 0x8000, scoped, tag = 'input window, operand 2, single buffered']
    #allocation8 [shape = 's32[1]{0}', space=sflag, size = 0x4, scoped, tag = 'scoped memory for tpu_custom_call.1']
    #allocation9 [shape = 'u8[2048]{0}', space=vmem, size = 0x800, scoped, tag = 'output window, operand 0, single buffered']
    %12 = vsyncpa [#allocation5], 0
    %13 = vsyncpa [#allocation8], 0
    %14 = vsyncpa [#allocation6], 0
    // Predicated region
    $region2: #{tpu_custom_call.1} parent=1 // pred_check
      _
    $region3: #{tpu_custom_call.1} parent=1 // pred_check_branch
      %16 = sbr.rel (0) target = $region5
    $region4: #{tpu_custom_call.1} parent=1 // pred_region
      _
    $region5: #{tpu_custom_call.1} parent=1 // pred_fallthru
      _
    // Predicated region
    $region6: #{tpu_custom_call.1} parent=1 // pred_check
      _
    $region7: #{tpu_custom_call.1} parent=1 // pred_check_branch
      %18 = sbr.rel (0) target = $region9
    $region8: #{tpu_custom_call.1} parent=1 // pred_region
      %20 = vsyncadd [#allocation5], 0
      %s22 = sshll.u32 %s1, 4
      %s23 = int_to_ptr.hbm [resolvable:$true] %s22
      %s24 = sshll.u32 [#allocation4], 4
      %s25 = int_to_ptr.vmem [resolvable:$true] %s24
      %27 = dma.hbm_to_vmem [thread:$0]  %s23, 64, %s25, [#allocation5]
    $region9: #{tpu_custom_call.1} parent=1 // pred_fallthru
      _
    // Predicated region
    $region10: #{tpu_custom_call.1} parent=1 // pred_check
      _
    $region11: #{tpu_custom_call.1} parent=1 // pred_check_branch
      %29 = sbr.rel (0) target = $region13
    $region12: #{tpu_custom_call.1} parent=1 // pred_region
      %31 = vsyncadd [#allocation8], 0
      %s32 = sshll.u32 %s2, 4
      %s33 = int_to_ptr.hbm [resolvable:$true] %s32
      %s34 = sshll.u32 [#allocation7], 4
      %s35 = int_to_ptr.vmem [resolvable:$true] %s34
      %40 = dma.hbm_to_vmem [thread:$0]  %s33, 1024, %s35, [#allocation8], 256, 256, 16
    $region13: #{tpu_custom_call.1} parent=1 // pred_fallthru
      _
    // Predicated region
    $region14: #{tpu_custom_call.1} parent=1 // pred_check
      _
    $region15: #{tpu_custom_call.1} parent=1 // pred_check_branch
      %42 = sbr.rel (0) target = $region17
    $region16: #{tpu_custom_call.1} parent=1 // pred_region
      _
    $region17: #{tpu_custom_call.1} parent=1 // pred_fallthru
      _
    // Predicated region
    $region18: #{tpu_custom_call.1} parent=1 // pred_check
      _
    $region19: #{tpu_custom_call.1} parent=1 // pred_check_branch
      %44 = sbr.rel (0) target = $region21
    $region20: #{tpu_custom_call.1} parent=1 // pred_region
      _
    $region21: #{tpu_custom_call.1} parent=1 // pred_fallthru
      _
    // Predicated region
    $region22: #{tpu_custom_call.1} parent=1 // pred_check
      _
    $region23: #{tpu_custom_call.1} parent=1 // pred_check_branch
      %46 = sbr.rel (0) target = $region25
    $region24: #{tpu_custom_call.1} parent=1 // pred_region
      %48 = dma.done [#allocation5], 64
    $region25: #{tpu_custom_call.1} parent=1 // pred_fallthru
      _
    // Predicated region
    $region26: #{tpu_custom_call.1} parent=1 // pred_check
      _
    $region27: #{tpu_custom_call.1} parent=1 // pred_check_branch
      %50 = sbr.rel (0) target = $region29
    $region28: #{tpu_custom_call.1} parent=1 // pred_region
      %52 = dma.done [#allocation8], 1024
    $region29: #{tpu_custom_call.1} parent=1 // pred_fallthru
      _
    %v53 = vld [vmem:[%s0] sm:$0xf]
    %v54 = vld [vmem:[#allocation4] sm:$0xf]
    %v55 = vlaneseq
    %v56 = vshrl.u32 %v55, 7
    %v57 = vadd.s32 %v56, 8
    %v58 = vadd.s32 %v56, 16
    %v59 = vadd.s32 %v56, 24
    %v60 = vadd.s32 %v56, 32
    %v61 = vadd.s32 %v56, 40
    %v62 = vadd.s32 %v56, 48
    %v63 = vadd.s32 %v56, 56
    %v64 = vadd.s32 %v56, 64
    %v65 = vadd.s32 %v56, 72
    %v66 = vadd.s32 %v56, 80
    %v67 = vadd.s32 %v56, 88
    %v68 = vadd.s32 %v56, 96
    %v69 = vadd.s32 %v56, 104
    %v70 = vadd.s32 %v56, 112
    %v71 = vadd.s32 %v56, 120
    %v72 = vadd.s32 %v56, 128
    %v73 = vadd.s32 %v56, 136
    %v74 = vadd.s32 %v56, 144
    %v75 = vadd.s32 %v56, 152
    %v76 = vadd.s32 %v56, 160
    %v77 = vadd.s32 %v56, 168
    %v78 = vadd.s32 %v56, 176
    %v79 = vadd.s32 %v56, 184
    %v80 = vadd.s32 %v56, 192
    %v81 = vadd.s32 %v56, 200
    %v82 = vadd.s32 %v56, 208
    %v83 = vadd.s32 %v56, 216
    %v84 = vadd.s32 %v56, 224
    %v85 = vadd.s32 %v56, 232
    %v86 = vadd.s32 %v56, 240
    %v87 = vadd.s32 %v56, 248
    %v88 = vperm.slane %v53, 0
    %v89 = vperm.slane %v53, 1
    %v90 = vperm.slane %v53, 2
    %v91 = vperm.slane %v53, 3
    %vm92 = vcmp.eq.s32.totalorder %v56, %v88
    %vm93 = vcmp.eq.s32.totalorder %v56, %v89
    %vm94 = vcmp.eq.s32.totalorder %v56, %v90
    %vm95 = vcmp.eq.s32.totalorder %v56, %v91
    %vm96 = vcmp.eq.s32.totalorder %v57, %v88
    %vm97 = vcmp.eq.s32.totalorder %v57, %v89
    %vm98 = vcmp.eq.s32.totalorder %v57, %v90
    %vm99 = vcmp.eq.s32.totalorder %v57, %v91
    %vm100 = vcmp.eq.s32.totalorder %v58, %v88
    %vm101 = vcmp.eq.s32.totalorder %v58, %v89
    %vm102 = vcmp.eq.s32.totalorder %v58, %v90
    %vm103 = vcmp.eq.s32.totalorder %v58, %v91
    %vm104 = vcmp.eq.s32.totalorder %v59, %v88
    %vm105 = vcmp.eq.s32.totalorder %v59, %v89
    %vm106 = vcmp.eq.s32.totalorder %v59, %v90
    %vm107 = vcmp.eq.s32.totalorder %v59, %v91
    %vm108 = vcmp.eq.s32.totalorder %v60, %v88
    %vm109 = vcmp.eq.s32.totalorder %v60, %v89
    %vm110 = vcmp.eq.s32.totalorder %v60, %v90
    %vm111 = vcmp.eq.s32.totalorder %v60, %v91
    %vm112 = vcmp.eq.s32.totalorder %v61, %v88
    %vm113 = vcmp.eq.s32.totalorder %v61, %v89
    %vm114 = vcmp.eq.s32.totalorder %v61, %v90
    %vm115 = vcmp.eq.s32.totalorder %v61, %v91
    %vm116 = vcmp.eq.s32.totalorder %v62, %v88
    %vm117 = vcmp.eq.s32.totalorder %v62, %v89
    %vm118 = vcmp.eq.s32.totalorder %v62, %v90
    %vm119 = vcmp.eq.s32.totalorder %v62, %v91
    %vm120 = vcmp.eq.s32.totalorder %v63, %v88
    %vm121 = vcmp.eq.s32.totalorder %v63, %v89
    %vm122 = vcmp.eq.s32.totalorder %v63, %v90
    %vm123 = vcmp.eq.s32.totalorder %v63, %v91
    %vm124 = vcmp.eq.s32.totalorder %v64, %v88
    %vm125 = vcmp.eq.s32.totalorder %v64, %v89
    %vm126 = vcmp.eq.s32.totalorder %v64, %v90
    %vm127 = vcmp.eq.s32.totalorder %v64, %v91
    %vm128 = vcmp.eq.s32.totalorder %v65, %v88
    %vm129 = vcmp.eq.s32.totalorder %v65, %v89
    %vm130 = vcmp.eq.s32.totalorder %v65, %v90
    %vm131 = vcmp.eq.s32.totalorder %v65, %v91
    %vm132 = vcmp.eq.s32.totalorder %v66, %v88
    %vm133 = vcmp.eq.s32.totalorder %v66, %v89
    %vm134 = vcmp.eq.s32.totalorder %v66, %v90
    %vm135 = vcmp.eq.s32.totalorder %v66, %v91
    %vm136 = vcmp.eq.s32.totalorder %v67, %v88
    %vm137 = vcmp.eq.s32.totalorder %v67, %v89
    %vm138 = vcmp.eq.s32.totalorder %v67, %v90
    %vm139 = vcmp.eq.s32.totalorder %v67, %v91
    %vm140 = vcmp.eq.s32.totalorder %v68, %v88
    %vm141 = vcmp.eq.s32.totalorder %v68, %v89
    %vm142 = vcmp.eq.s32.totalorder %v68, %v90
    %vm143 = vcmp.eq.s32.totalorder %v68, %v91
    %vm144 = vcmp.eq.s32.totalorder %v69, %v88
    %vm145 = vcmp.eq.s32.totalorder %v69, %v89
    %vm146 = vcmp.eq.s32.totalorder %v69, %v90
    %vm147 = vcmp.eq.s32.totalorder %v69, %v91
    %vm148 = vcmp.eq.s32.totalorder %v70, %v88
    %vm149 = vcmp.eq.s32.totalorder %v70, %v89
    %vm150 = vcmp.eq.s32.totalorder %v70, %v90
    %vm151 = vcmp.eq.s32.totalorder %v70, %v91
    %vm152 = vcmp.eq.s32.totalorder %v71, %v88
    %vm153 = vcmp.eq.s32.totalorder %v71, %v89
    %vm154 = vcmp.eq.s32.totalorder %v71, %v90
    %vm155 = vcmp.eq.s32.totalorder %v71, %v91
    %vm156 = vcmp.eq.s32.totalorder %v72, %v88
    %vm157 = vcmp.eq.s32.totalorder %v72, %v89
    %vm158 = vcmp.eq.s32.totalorder %v72, %v90
    %vm159 = vcmp.eq.s32.totalorder %v72, %v91
    %vm160 = vcmp.eq.s32.totalorder %v73, %v88
    %vm161 = vcmp.eq.s32.totalorder %v73, %v89
    %vm162 = vcmp.eq.s32.totalorder %v73, %v90
    %vm163 = vcmp.eq.s32.totalorder %v73, %v91
    %vm164 = vcmp.eq.s32.totalorder %v74, %v88
    %vm165 = vcmp.eq.s32.totalorder %v74, %v89
    %vm166 = vcmp.eq.s32.totalorder %v74, %v90
    %vm167 = vcmp.eq.s32.totalorder %v74, %v91
    %vm168 = vcmp.eq.s32.totalorder %v75, %v88
    %vm169 = vcmp.eq.s32.totalorder %v75, %v89
    %vm170 = vcmp.eq.s32.totalorder %v75, %v90
    %vm171 = vcmp.eq.s32.totalorder %v75, %v91
    %vm172 = vcmp.eq.s32.totalorder %v76, %v88
    %vm173 = vcmp.eq.s32.totalorder %v76, %v89
    %vm174 = vcmp.eq.s32.totalorder %v76, %v90
    %vm175 = vcmp.eq.s32.totalorder %v76, %v91
    %vm176 = vcmp.eq.s32.totalorder %v77, %v88
    %vm177 = vcmp.eq.s32.totalorder %v77, %v89
    %vm178 = vcmp.eq.s32.totalorder %v77, %v90
    %vm179 = vcmp.eq.s32.totalorder %v77, %v91
    %vm180 = vcmp.eq.s32.totalorder %v78, %v88
    %vm181 = vcmp.eq.s32.totalorder %v78, %v89
    %vm182 = vcmp.eq.s32.totalorder %v78, %v90
    %vm183 = vcmp.eq.s32.totalorder %v78, %v91
    %vm184 = vcmp.eq.s32.totalorder %v79, %v88
    %vm185 = vcmp.eq.s32.totalorder %v79, %v89
    %vm186 = vcmp.eq.s32.totalorder %v79, %v90
    %vm187 = vcmp.eq.s32.totalorder %v79, %v91
    %vm188 = vcmp.eq.s32.totalorder %v80, %v88
    %vm189 = vcmp.eq.s32.totalorder %v80, %v89
    %vm190 = vcmp.eq.s32.totalorder %v80, %v90
    %vm191 = vcmp.eq.s32.totalorder %v80, %v91
    %vm192 = vcmp.eq.s32.totalorder %v81, %v88
    %vm193 = vcmp.eq.s32.totalorder %v81, %v89
    %vm194 = vcmp.eq.s32.totalorder %v81, %v90
    %vm195 = vcmp.eq.s32.totalorder %v81, %v91
    %vm196 = vcmp.eq.s32.totalorder %v82, %v88
    %vm197 = vcmp.eq.s32.totalorder %v82, %v89
    %vm198 = vcmp.eq.s32.totalorder %v82, %v90
    %vm199 = vcmp.eq.s32.totalorder %v82, %v91
    %vm200 = vcmp.eq.s32.totalorder %v83, %v88
    %vm201 = vcmp.eq.s32.totalorder %v83, %v89
    %vm202 = vcmp.eq.s32.totalorder %v83, %v90
    %vm203 = vcmp.eq.s32.totalorder %v83, %v91
    %vm204 = vcmp.eq.s32.totalorder %v84, %v88
    %vm205 = vcmp.eq.s32.totalorder %v84, %v89
    %vm206 = vcmp.eq.s32.totalorder %v84, %v90
    %vm207 = vcmp.eq.s32.totalorder %v84, %v91
    %vm208 = vcmp.eq.s32.totalorder %v85, %v88
    %vm209 = vcmp.eq.s32.totalorder %v85, %v89
    %vm210 = vcmp.eq.s32.totalorder %v85, %v90
    %vm211 = vcmp.eq.s32.totalorder %v85, %v91
    %vm212 = vcmp.eq.s32.totalorder %v86, %v88
    %vm213 = vcmp.eq.s32.totalorder %v86, %v89
    %vm214 = vcmp.eq.s32.totalorder %v86, %v90
    %vm215 = vcmp.eq.s32.totalorder %v86, %v91
    %vm216 = vcmp.eq.s32.totalorder %v87, %v88
    %vm217 = vcmp.eq.s32.totalorder %v87, %v89
    %vm218 = vcmp.eq.s32.totalorder %v87, %v90
    %vm219 = vcmp.eq.s32.totalorder %v87, %v91
    %v220 = vperm.slane %v54, 0
    %v221 = vperm.slane %v54, 1
    %v222 = vperm.slane %v54, 2
    %v223 = vperm.slane %v54, 3
    %vm224 = vcmp.eq.s32.totalorder %v56, %v220
    %vm225 = vcmp.eq.s32.totalorder %v56, %v221
    %vm226 = vcmp.eq.s32.totalorder %v56, %v222
    %vm227 = vcmp.eq.s32.totalorder %v56, %v223
    %vm228 = vcmp.eq.s32.totalorder %v57, %v220
    %vm229 = vcmp.eq.s32.totalorder %v57, %v221
    %vm230 = vcmp.eq.s32.totalorder %v57, %v222
    %vm231 = vcmp.eq.s32.totalorder %v57, %v223
    %vm232 = vcmp.eq.s32.totalorder %v58, %v220
    %vm233 = vcmp.eq.s32.totalorder %v58, %v221
    %vm234 = vcmp.eq.s32.totalorder %v58, %v222
    %vm235 = vcmp.eq.s32.totalorder %v58, %v223
    %vm236 = vcmp.eq.s32.totalorder %v59, %v220
    %vm237 = vcmp.eq.s32.totalorder %v59, %v221
    %vm238 = vcmp.eq.s32.totalorder %v59, %v222
    %vm239 = vcmp.eq.s32.totalorder %v59, %v223
    %vm240 = vcmp.eq.s32.totalorder %v60, %v220
    %vm241 = vcmp.eq.s32.totalorder %v60, %v221
    %vm242 = vcmp.eq.s32.totalorder %v60, %v222
    %vm243 = vcmp.eq.s32.totalorder %v60, %v223
    %vm244 = vcmp.eq.s32.totalorder %v61, %v220
    %vm245 = vcmp.eq.s32.totalorder %v61, %v221
    %vm246 = vcmp.eq.s32.totalorder %v61, %v222
    %vm247 = vcmp.eq.s32.totalorder %v61, %v223
    %vm248 = vcmp.eq.s32.totalorder %v62, %v220
    %vm249 = vcmp.eq.s32.totalorder %v62, %v221
    %vm250 = vcmp.eq.s32.totalorder %v62, %v222
    %vm251 = vcmp.eq.s32.totalorder %v62, %v223
    %vm252 = vcmp.eq.s32.totalorder %v63, %v220
    %vm253 = vcmp.eq.s32.totalorder %v63, %v221
    %vm254 = vcmp.eq.s32.totalorder %v63, %v222
    %vm255 = vcmp.eq.s32.totalorder %v63, %v223
    %vm256 = vcmp.eq.s32.totalorder %v64, %v220
    %vm257 = vcmp.eq.s32.totalorder %v64, %v221
    %vm258 = vcmp.eq.s32.totalorder %v64, %v222
    %vm259 = vcmp.eq.s32.totalorder %v64, %v223
    %vm260 = vcmp.eq.s32.totalorder %v65, %v220
    %vm261 = vcmp.eq.s32.totalorder %v65, %v221
    %vm262 = vcmp.eq.s32.totalorder %v65, %v222
    %vm263 = vcmp.eq.s32.totalorder %v65, %v223
    %vm264 = vcmp.eq.s32.totalorder %v66, %v220
    %vm265 = vcmp.eq.s32.totalorder %v66, %v221
    %vm266 = vcmp.eq.s32.totalorder %v66, %v222
    %vm267 = vcmp.eq.s32.totalorder %v66, %v223
    %vm268 = vcmp.eq.s32.totalorder %v67, %v220
    %vm269 = vcmp.eq.s32.totalorder %v67, %v221
    %vm270 = vcmp.eq.s32.totalorder %v67, %v222
    %vm271 = vcmp.eq.s32.totalorder %v67, %v223
    %vm272 = vcmp.eq.s32.totalorder %v68, %v220
    %vm273 = vcmp.eq.s32.totalorder %v68, %v221
    %vm274 = vcmp.eq.s32.totalorder %v68, %v222
    %vm275 = vcmp.eq.s32.totalorder %v68, %v223
    %vm276 = vcmp.eq.s32.totalorder %v69, %v220
    %vm277 = vcmp.eq.s32.totalorder %v69, %v221
    %vm278 = vcmp.eq.s32.totalorder %v69, %v222
    %vm279 = vcmp.eq.s32.totalorder %v69, %v223
    %vm280 = vcmp.eq.s32.totalorder %v70, %v220
    %vm281 = vcmp.eq.s32.totalorder %v70, %v221
    %vm282 = vcmp.eq.s32.totalorder %v70, %v222
    %vm283 = vcmp.eq.s32.totalorder %v70, %v223
    %vm284 = vcmp.eq.s32.totalorder %v71, %v220
    %vm285 = vcmp.eq.s32.totalorder %v71, %v221
    %vm286 = vcmp.eq.s32.totalorder %v71, %v222
    %vm287 = vcmp.eq.s32.totalorder %v71, %v223
    %vm288 = vcmp.eq.s32.totalorder %v72, %v220
    %vm289 = vcmp.eq.s32.totalorder %v72, %v221
    %vm290 = vcmp.eq.s32.totalorder %v72, %v222
    %vm291 = vcmp.eq.s32.totalorder %v72, %v223
    %vm292 = vcmp.eq.s32.totalorder %v73, %v220
    %vm293 = vcmp.eq.s32.totalorder %v73, %v221
    %vm294 = vcmp.eq.s32.totalorder %v73, %v222
    %vm295 = vcmp.eq.s32.totalorder %v73, %v223
    %vm296 = vcmp.eq.s32.totalorder %v74, %v220
    %vm297 = vcmp.eq.s32.totalorder %v74, %v221
    %vm298 = vcmp.eq.s32.totalorder %v74, %v222
    %vm299 = vcmp.eq.s32.totalorder %v74, %v223
    %vm300 = vcmp.eq.s32.totalorder %v75, %v220
    %vm301 = vcmp.eq.s32.totalorder %v75, %v221
    %vm302 = vcmp.eq.s32.totalorder %v75, %v222
    %vm303 = vcmp.eq.s32.totalorder %v75, %v223
    %vm304 = vcmp.eq.s32.totalorder %v76, %v220
    %vm305 = vcmp.eq.s32.totalorder %v76, %v221
    %vm306 = vcmp.eq.s32.totalorder %v76, %v222
    %vm307 = vcmp.eq.s32.totalorder %v76, %v223
    %vm308 = vcmp.eq.s32.totalorder %v77, %v220
    %vm309 = vcmp.eq.s32.totalorder %v77, %v221
    %vm310 = vcmp.eq.s32.totalorder %v77, %v222
    %vm311 = vcmp.eq.s32.totalorder %v77, %v223
    %vm312 = vcmp.eq.s32.totalorder %v78, %v220
    %vm313 = vcmp.eq.s32.totalorder %v78, %v221
    %vm314 = vcmp.eq.s32.totalorder %v78, %v222
    %vm315 = vcmp.eq.s32.totalorder %v78, %v223
    %vm316 = vcmp.eq.s32.totalorder %v79, %v220
    %vm317 = vcmp.eq.s32.totalorder %v79, %v221
    %vm318 = vcmp.eq.s32.totalorder %v79, %v222
    %vm319 = vcmp.eq.s32.totalorder %v79, %v223
    %vm320 = vcmp.eq.s32.totalorder %v80, %v220
    %vm321 = vcmp.eq.s32.totalorder %v80, %v221
    %vm322 = vcmp.eq.s32.totalorder %v80, %v222
    %vm323 = vcmp.eq.s32.totalorder %v80, %v223
    %vm324 = vcmp.eq.s32.totalorder %v81, %v220
    %vm325 = vcmp.eq.s32.totalorder %v81, %v221
    %vm326 = vcmp.eq.s32.totalorder %v81, %v222
    %vm327 = vcmp.eq.s32.totalorder %v81, %v223
    %vm328 = vcmp.eq.s32.totalorder %v82, %v220
    %vm329 = vcmp.eq.s32.totalorder %v82, %v221
    %vm330 = vcmp.eq.s32.totalorder %v82, %v222
    %vm331 = vcmp.eq.s32.totalorder %v82, %v223
    %vm332 = vcmp.eq.s32.totalorder %v83, %v220
    %vm333 = vcmp.eq.s32.totalorder %v83, %v221
    %vm334 = vcmp.eq.s32.totalorder %v83, %v222
    %vm335 = vcmp.eq.s32.totalorder %v83, %v223
    %vm336 = vcmp.eq.s32.totalorder %v84, %v220
    %vm337 = vcmp.eq.s32.totalorder %v84, %v221
    %vm338 = vcmp.eq.s32.totalorder %v84, %v222
    %vm339 = vcmp.eq.s32.totalorder %v84, %v223
    %vm340 = vcmp.eq.s32.totalorder %v85, %v220
    %vm341 = vcmp.eq.s32.totalorder %v85, %v221
    %vm342 = vcmp.eq.s32.totalorder %v85, %v222
    %vm343 = vcmp.eq.s32.totalorder %v85, %v223
    %vm344 = vcmp.eq.s32.totalorder %v86, %v220
    %vm345 = vcmp.eq.s32.totalorder %v86, %v221
    %vm346 = vcmp.eq.s32.totalorder %v86, %v222
    %vm347 = vcmp.eq.s32.totalorder %v86, %v223
    %vm348 = vcmp.eq.s32.totalorder %v87, %v220
    %vm349 = vcmp.eq.s32.totalorder %v87, %v221
    %vm350 = vcmp.eq.s32.totalorder %v87, %v222
    %vm351 = vcmp.eq.s32.totalorder %v87, %v223
    %vm352 = vmor %vm92, %vm224
    %vm353 = vmor %vm93, %vm225
    %vm354 = vmor %vm94, %vm226
    %vm355 = vmor %vm95, %vm227
    %vm356 = vmor %vm96, %vm228
    %vm357 = vmor %vm97, %vm229
    %vm358 = vmor %vm98, %vm230
    %vm359 = vmor %vm99, %vm231
    %vm360 = vmor %vm100, %vm232
    %vm361 = vmor %vm101, %vm233
    %vm362 = vmor %vm102, %vm234
    %vm363 = vmor %vm103, %vm235
    %vm364 = vmor %vm104, %vm236
    %vm365 = vmor %vm105, %vm237
    %vm366 = vmor %vm106, %vm238
    %vm367 = vmor %vm107, %vm239
    %vm368 = vmor %vm108, %vm240
    %vm369 = vmor %vm109, %vm241
    %vm370 = vmor %vm110, %vm242
    %vm371 = vmor %vm111, %vm243
    %vm372 = vmor %vm112, %vm244
    %vm373 = vmor %vm113, %vm245
    %vm374 = vmor %vm114, %vm246
    %vm375 = vmor %vm115, %vm247
    %vm376 = vmor %vm116, %vm248
    %vm377 = vmor %vm117, %vm249
    %vm378 = vmor %vm118, %vm250
    %vm379 = vmor %vm119, %vm251
    %vm380 = vmor %vm120, %vm252
    %vm381 = vmor %vm121, %vm253
    %vm382 = vmor %vm122, %vm254
    %vm383 = vmor %vm123, %vm255
    %vm384 = vmor %vm124, %vm256
    %vm385 = vmor %vm125, %vm257
    %vm386 = vmor %vm126, %vm258
    %vm387 = vmor %vm127, %vm259
    %vm388 = vmor %vm128, %vm260
    %vm389 = vmor %vm129, %vm261
    %vm390 = vmor %vm130, %vm262
    %vm391 = vmor %vm131, %vm263
    %vm392 = vmor %vm132, %vm264
    %vm393 = vmor %vm133, %vm265
    %vm394 = vmor %vm134, %vm266
    %vm395 = vmor %vm135, %vm267
    %vm396 = vmor %vm136, %vm268
    %vm397 = vmor %vm137, %vm269
    %vm398 = vmor %vm138, %vm270
    %vm399 = vmor %vm139, %vm271
    %vm400 = vmor %vm140, %vm272
    %vm401 = vmor %vm141, %vm273
    %vm402 = vmor %vm142, %vm274
    %vm403 = vmor %vm143, %vm275
    %vm404 = vmor %vm144, %vm276
    %vm405 = vmor %vm145, %vm277
    %vm406 = vmor %vm146, %vm278
    %vm407 = vmor %vm147, %vm279
    %vm408 = vmor %vm148, %vm280
    %vm409 = vmor %vm149, %vm281
    %vm410 = vmor %vm150, %vm282
    %vm411 = vmor %vm151, %vm283
    %vm412 = vmor %vm152, %vm284
    %vm413 = vmor %vm153, %vm285
    %vm414 = vmor %vm154, %vm286
    %vm415 = vmor %vm155, %vm287
    %vm416 = vmor %vm156, %vm288
    %vm417 = vmor %vm157, %vm289
    %vm418 = vmor %vm158, %vm290
    %vm419 = vmor %vm159, %vm291
    %vm420 = vmor %vm160, %vm292
    %vm421 = vmor %vm161, %vm293
    %vm422 = vmor %vm162, %vm294
    %vm423 = vmor %vm163, %vm295
    %vm424 = vmor %vm164, %vm296
    %vm425 = vmor %vm165, %vm297
    %vm426 = vmor %vm166, %vm298
    %vm427 = vmor %vm167, %vm299
    %vm428 = vmor %vm168, %vm300
    %vm429 = vmor %vm169, %vm301
    %vm430 = vmor %vm170, %vm302
    %vm431 = vmor %vm171, %vm303
    %vm432 = vmor %vm172, %vm304
    %vm433 = vmor %vm173, %vm305
    %vm434 = vmor %vm174, %vm306
    %vm435 = vmor %vm175, %vm307
    %vm436 = vmor %vm176, %vm308
    %vm437 = vmor %vm177, %vm309
    %vm438 = vmor %vm178, %vm310
    %vm439 = vmor %vm179, %vm311
    %vm440 = vmor %vm180, %vm312
    %vm441 = vmor %vm181, %vm313
    %vm442 = vmor %vm182, %vm314
    %vm443 = vmor %vm183, %vm315
    %vm444 = vmor %vm184, %vm316
    %vm445 = vmor %vm185, %vm317
    %vm446 = vmor %vm186, %vm318
    %vm447 = vmor %vm187, %vm319
    %vm448 = vmor %vm188, %vm320
    %vm449 = vmor %vm189, %vm321
    %vm450 = vmor %vm190, %vm322
    %vm451 = vmor %vm191, %vm323
    %vm452 = vmor %vm192, %vm324
    %vm453 = vmor %vm193, %vm325
    %vm454 = vmor %vm194, %vm326
    %vm455 = vmor %vm195, %vm327
    %vm456 = vmor %vm196, %vm328
    %vm457 = vmor %vm197, %vm329
    %vm458 = vmor %vm198, %vm330
    %vm459 = vmor %vm199, %vm331
    %vm460 = vmor %vm200, %vm332
    %vm461 = vmor %vm201, %vm333
    %vm462 = vmor %vm202, %vm334
    %vm463 = vmor %vm203, %vm335
    %vm464 = vmor %vm204, %vm336
    %vm465 = vmor %vm205, %vm337
    %vm466 = vmor %vm206, %vm338
    %vm467 = vmor %vm207, %vm339
    %vm468 = vmor %vm208, %vm340
    %vm469 = vmor %vm209, %vm341
    %vm470 = vmor %vm210, %vm342
    %vm471 = vmor %vm211, %vm343
    %vm472 = vmor %vm212, %vm344
    %vm473 = vmor %vm213, %vm345
    %vm474 = vmor %vm214, %vm346
    %vm475 = vmor %vm215, %vm347
    %vm476 = vmor %vm216, %vm348
    %vm477 = vmor %vm217, %vm349
    %vm478 = vmor %vm218, %vm350
    %vm479 = vmor %vm219, %vm351
    %v480 = vsel %vm352, 1, 0
    %v481 = vsel %vm353, 1, 0
    %v482 = vsel %vm354, 1, 0
    %v483 = vsel %vm355, 1, 0
    %v484 = vsel %vm356, 1, 0
    %v485 = vsel %vm357, 1, 0
    %v486 = vsel %vm358, 1, 0
    %v487 = vsel %vm359, 1, 0
    %v488 = vsel %vm360, 1, 0
    %v489 = vsel %vm361, 1, 0
    %v490 = vsel %vm362, 1, 0
    %v491 = vsel %vm363, 1, 0
    %v492 = vsel %vm364, 1, 0
    %v493 = vsel %vm365, 1, 0
    %v494 = vsel %vm366, 1, 0
    %v495 = vsel %vm367, 1, 0
    %v496 = vsel %vm368, 1, 0
    %v497 = vsel %vm369, 1, 0
    %v498 = vsel %vm370, 1, 0
    %v499 = vsel %vm371, 1, 0
    %v500 = vsel %vm372, 1, 0
    %v501 = vsel %vm373, 1, 0
    %v502 = vsel %vm374, 1, 0
    %v503 = vsel %vm375, 1, 0
    %v504 = vsel %vm376, 1, 0
    %v505 = vsel %vm377, 1, 0
    %v506 = vsel %vm378, 1, 0
    %v507 = vsel %vm379, 1, 0
    %v508 = vsel %vm380, 1, 0
    %v509 = vsel %vm381, 1, 0
    %v510 = vsel %vm382, 1, 0
    %v511 = vsel %vm383, 1, 0
    %v512 = vsel %vm384, 1, 0
    %v513 = vsel %vm385, 1, 0
    %v514 = vsel %vm386, 1, 0
    %v515 = vsel %vm387, 1, 0
    %v516 = vsel %vm388, 1, 0
    %v517 = vsel %vm389, 1, 0
    %v518 = vsel %vm390, 1, 0
    %v519 = vsel %vm391, 1, 0
    %v520 = vsel %vm392, 1, 0
    %v521 = vsel %vm393, 1, 0
    %v522 = vsel %vm394, 1, 0
    %v523 = vsel %vm395, 1, 0
    %v524 = vsel %vm396, 1, 0
    %v525 = vsel %vm397, 1, 0
    %v526 = vsel %vm398, 1, 0
    %v527 = vsel %vm399, 1, 0
    %v528 = vsel %vm400, 1, 0
    %v529 = vsel %vm401, 1, 0
    %v530 = vsel %vm402, 1, 0
    %v531 = vsel %vm403, 1, 0
    %v532 = vsel %vm404, 1, 0
    %v533 = vsel %vm405, 1, 0
    %v534 = vsel %vm406, 1, 0
    %v535 = vsel %vm407, 1, 0
    %v536 = vsel %vm408, 1, 0
    %v537 = vsel %vm409, 1, 0
    %v538 = vsel %vm410, 1, 0
    %v539 = vsel %vm411, 1, 0
    %v540 = vsel %vm412, 1, 0
    %v541 = vsel %vm413, 1, 0
    %v542 = vsel %vm414, 1, 0
    %v543 = vsel %vm415, 1, 0
    %v544 = vsel %vm416, 1, 0
    %v545 = vsel %vm417, 1, 0
    %v546 = vsel %vm418, 1, 0
    %v547 = vsel %vm419, 1, 0
    %v548 = vsel %vm420, 1, 0
    %v549 = vsel %vm421, 1, 0
    %v550 = vsel %vm422, 1, 0
    %v551 = vsel %vm423, 1, 0
    %v552 = vsel %vm424, 1, 0
    %v553 = vsel %vm425, 1, 0
    %v554 = vsel %vm426, 1, 0
    %v555 = vsel %vm427, 1, 0
    %v556 = vsel %vm428, 1, 0
    %v557 = vsel %vm429, 1, 0
    %v558 = vsel %vm430, 1, 0
    %v559 = vsel %vm431, 1, 0
    %v560 = vsel %vm432, 1, 0
    %v561 = vsel %vm433, 1, 0
    %v562 = vsel %vm434, 1, 0
    %v563 = vsel %vm435, 1, 0
    %v564 = vsel %vm436, 1, 0
    %v565 = vsel %vm437, 1, 0
    %v566 = vsel %vm438, 1, 0
    %v567 = vsel %vm439, 1, 0
    %v568 = vsel %vm440, 1, 0
    %v569 = vsel %vm441, 1, 0
    %v570 = vsel %vm442, 1, 0
    %v571 = vsel %vm443, 1, 0
    %v572 = vsel %vm444, 1, 0
    %v573 = vsel %vm445, 1, 0
    %v574 = vsel %vm446, 1, 0
    %v575 = vsel %vm447, 1, 0
    %v576 = vsel %vm448, 1, 0
    %v577 = vsel %vm449, 1, 0
    %v578 = vsel %vm450, 1, 0
    %v579 = vsel %vm451, 1, 0
    %v580 = vsel %vm452, 1, 0
    %v581 = vsel %vm453, 1, 0
    %v582 = vsel %vm454, 1, 0
    %v583 = vsel %vm455, 1, 0
    %v584 = vsel %vm456, 1, 0
    %v585 = vsel %vm457, 1, 0
    %v586 = vsel %vm458, 1, 0
    %v587 = vsel %vm459, 1, 0
    %v588 = vsel %vm460, 1, 0
    %v589 = vsel %vm461, 1, 0
    %v590 = vsel %vm462, 1, 0
    %v591 = vsel %vm463, 1, 0
    %v592 = vsel %vm464, 1, 0
    %v593 = vsel %vm465, 1, 0
    %v594 = vsel %vm466, 1, 0
    %v595 = vsel %vm467, 1, 0
    %v596 = vsel %vm468, 1, 0
    %v597 = vsel %vm469, 1, 0
    %v598 = vsel %vm470, 1, 0
    %v599 = vsel %vm471, 1, 0
    %v600 = vsel %vm472, 1, 0
    %v601 = vsel %vm473, 1, 0
    %v602 = vsel %vm474, 1, 0
    %v603 = vsel %vm475, 1, 0
    %v604 = vsel %vm476, 1, 0
    %v605 = vsel %vm477, 1, 0
    %v606 = vsel %vm478, 1, 0
    %v607 = vsel %vm479, 1, 0
    %v608 = vcvt.s32.f32 %v480
    %v609 = vcvt.s32.f32 %v481
    %v610 = vcvt.s32.f32 %v482
    %v611 = vcvt.s32.f32 %v483
    %v612 = vcvt.s32.f32 %v484
    %v613 = vcvt.s32.f32 %v485
    %v614 = vcvt.s32.f32 %v486
    %v615 = vcvt.s32.f32 %v487
    %v616 = vcvt.s32.f32 %v488
    %v617 = vcvt.s32.f32 %v489
    %v618 = vcvt.s32.f32 %v490
    %v619 = vcvt.s32.f32 %v491
    %v620 = vcvt.s32.f32 %v492
    %v621 = vcvt.s32.f32 %v493
    %v622 = vcvt.s32.f32 %v494
    %v623 = vcvt.s32.f32 %v495
    %v624 = vcvt.s32.f32 %v496
    %v625 = vcvt.s32.f32 %v497
    %v626 = vcvt.s32.f32 %v498
    %v627 = vcvt.s32.f32 %v499
    %v628 = vcvt.s32.f32 %v500
    %v629 = vcvt.s32.f32 %v501
    %v630 = vcvt.s32.f32 %v502
    %v631 = vcvt.s32.f32 %v503
    %v632 = vcvt.s32.f32 %v504
    %v633 = vcvt.s32.f32 %v505
    %v634 = vcvt.s32.f32 %v506
    %v635 = vcvt.s32.f32 %v507
    %v636 = vcvt.s32.f32 %v508
    %v637 = vcvt.s32.f32 %v509
    %v638 = vcvt.s32.f32 %v510
    %v639 = vcvt.s32.f32 %v511
    %v640 = vcvt.s32.f32 %v512
    %v641 = vcvt.s32.f32 %v513
    %v642 = vcvt.s32.f32 %v514
    %v643 = vcvt.s32.f32 %v515
    %v644 = vcvt.s32.f32 %v516
    %v645 = vcvt.s32.f32 %v517
    %v646 = vcvt.s32.f32 %v518
    %v647 = vcvt.s32.f32 %v519
    %v648 = vcvt.s32.f32 %v520
    %v649 = vcvt.s32.f32 %v521
    %v650 = vcvt.s32.f32 %v522
    %v651 = vcvt.s32.f32 %v523
    %v652 = vcvt.s32.f32 %v524
    %v653 = vcvt.s32.f32 %v525
    %v654 = vcvt.s32.f32 %v526
    %v655 = vcvt.s32.f32 %v527
    %v656 = vcvt.s32.f32 %v528
    %v657 = vcvt.s32.f32 %v529
    %v658 = vcvt.s32.f32 %v530
    %v659 = vcvt.s32.f32 %v531
    %v660 = vcvt.s32.f32 %v532
    %v661 = vcvt.s32.f32 %v533
    %v662 = vcvt.s32.f32 %v534
    %v663 = vcvt.s32.f32 %v535
    %v664 = vcvt.s32.f32 %v536
    %v665 = vcvt.s32.f32 %v537
    %v666 = vcvt.s32.f32 %v538
    %v667 = vcvt.s32.f32 %v539
    %v668 = vcvt.s32.f32 %v540
    %v669 = vcvt.s32.f32 %v541
    %v670 = vcvt.s32.f32 %v542
    %v671 = vcvt.s32.f32 %v543
    %v672 = vcvt.s32.f32 %v544
    %v673 = vcvt.s32.f32 %v545
    %v674 = vcvt.s32.f32 %v546
    %v675 = vcvt.s32.f32 %v547
    %v676 = vcvt.s32.f32 %v548
    %v677 = vcvt.s32.f32 %v549
    %v678 = vcvt.s32.f32 %v550
    %v679 = vcvt.s32.f32 %v551
    %v680 = vcvt.s32.f32 %v552
    %v681 = vcvt.s32.f32 %v553
    %v682 = vcvt.s32.f32 %v554
    %v683 = vcvt.s32.f32 %v555
    %v684 = vcvt.s32.f32 %v556
    %v685 = vcvt.s32.f32 %v557
    %v686 = vcvt.s32.f32 %v558
    %v687 = vcvt.s32.f32 %v559
    %v688 = vcvt.s32.f32 %v560
    %v689 = vcvt.s32.f32 %v561
    %v690 = vcvt.s32.f32 %v562
    %v691 = vcvt.s32.f32 %v563
    %v692 = vcvt.s32.f32 %v564
    %v693 = vcvt.s32.f32 %v565
    %v694 = vcvt.s32.f32 %v566
    %v695 = vcvt.s32.f32 %v567
    %v696 = vcvt.s32.f32 %v568
    %v697 = vcvt.s32.f32 %v569
    %v698 = vcvt.s32.f32 %v570
    %v699 = vcvt.s32.f32 %v571
    %v700 = vcvt.s32.f32 %v572
    %v701 = vcvt.s32.f32 %v573
    %v702 = vcvt.s32.f32 %v574
    %v703 = vcvt.s32.f32 %v575
    %v704 = vcvt.s32.f32 %v576
    %v705 = vcvt.s32.f32 %v577
    %v706 = vcvt.s32.f32 %v578
    %v707 = vcvt.s32.f32 %v579
    %v708 = vcvt.s32.f32 %v580
    %v709 = vcvt.s32.f32 %v581
    %v710 = vcvt.s32.f32 %v582
    %v711 = vcvt.s32.f32 %v583
    %v712 = vcvt.s32.f32 %v584
    %v713 = vcvt.s32.f32 %v585
    %v714 = vcvt.s32.f32 %v586
    %v715 = vcvt.s32.f32 %v587
    %v716 = vcvt.s32.f32 %v588
    %v717 = vcvt.s32.f32 %v589
    %v718 = vcvt.s32.f32 %v590
    %v719 = vcvt.s32.f32 %v591
    %v720 = vcvt.s32.f32 %v592
    %v721 = vcvt.s32.f32 %v593
    %v722 = vcvt.s32.f32 %v594
    %v723 = vcvt.s32.f32 %v595
    %v724 = vcvt.s32.f32 %v596
    %v725 = vcvt.s32.f32 %v597
    %v726 = vcvt.s32.f32 %v598
    %v727 = vcvt.s32.f32 %v599
    %v728 = vcvt.s32.f32 %v600
    %v729 = vcvt.s32.f32 %v601
    %v730 = vcvt.s32.f32 %v602
    %v731 = vcvt.s32.f32 %v603
    %v732 = vcvt.s32.f32 %v604
    %v733 = vcvt.s32.f32 %v605
    %v734 = vcvt.s32.f32 %v606
    %v735 = vcvt.s32.f32 %v607
    %v736 = vld [vmem:[#allocation7] sm:$0xff]
    %v737 = vld [vmem:[#allocation7 + $0x8] sm:$0xff]
    %v738 = vld [vmem:[#allocation7 + $0x10] sm:$0xff]
    %v739 = vld [vmem:[#allocation7 + $0x18] sm:$0xff]
    %v740 = vld [vmem:[#allocation7 + $0x20] sm:$0xff]
    %v741 = vld [vmem:[#allocation7 + $0x28] sm:$0xff]
    %v742 = vld [vmem:[#allocation7 + $0x30] sm:$0xff]
    %v743 = vld [vmem:[#allocation7 + $0x38] sm:$0xff]
    %744 = vmatpush.msra.mxu0 %v668
    %745 = vmatpush.msra.mxu0 %v664
    %746 = vmatpush.msra.mxu0 %v660
    %747 = vmatpush.msra.mxu0 %v656
    %748 = vmatpush.msra.mxu0 %v652
    %749 = vmatpush.msra.mxu0 %v648
    %750 = vmatpush.msra.mxu0 %v644
    %751 = vmatpush.msra.mxu0 %v640
    %752 = vmatpush.msra.mxu0 %v636
    %753 = vmatpush.msra.mxu0 %v632
    %754 = vmatpush.msra.mxu0 %v628
    %755 = vmatpush.msra.mxu0 %v624
    %756 = vmatpush.msra.mxu0 %v620
    %757 = vmatpush.msra.mxu0 %v616
    %758 = vmatpush.msra.mxu0 %v612
    %759 = vmatpush.msra.mxu0 %v608
    %760 = vmatmul.f32.gmra.mxu0 %v736
    %v761 = vpop.f32.mrf.mxu0
    %v762 = vadd.f32 0.0, %v761
    %763 = vmatmul.f32.gmra.mxu0 %v738
    %v764 = vpop.f32.mrf.mxu0
    %v765 = vadd.f32 0.0, %v764
    %766 = vmatmul.f32.gmra.mxu0 %v740
    %v767 = vpop.f32.mrf.mxu0
    %v768 = vadd.f32 0.0, %v767
    %769 = vmatmul.f32.gmra.mxu0 %v742
    %v770 = vpop.f32.mrf.mxu0
    %v771 = vadd.f32 0.0, %v770
    %772 = vdwg.mxu0
    %773 = vmatpush.msra.mxu0 %v732
    %774 = vmatpush.msra.mxu0 %v728
    %775 = vmatpush.msra.mxu0 %v724
    %776 = vmatpush.msra.mxu0 %v720
    %777 = vmatpush.msra.mxu0 %v716
    %778 = vmatpush.msra.mxu0 %v712
    %779 = vmatpush.msra.mxu0 %v708
    %780 = vmatpush.msra.mxu0 %v704
    %781 = vmatpush.msra.mxu0 %v700
    %782 = vmatpush.msra.mxu0 %v696
    %783 = vmatpush.msra.mxu0 %v692
    %784 = vmatpush.msra.mxu0 %v688
    %785 = vmatpush.msra.mxu0 %v684
    %786 = vmatpush.msra.mxu0 %v680
    %787 = vmatpush.msra.mxu0 %v676
    %788 = vmatpush.msra.mxu0 %v672
    %789 = vmatmul.f32.gmra.mxu0 %v737
    %v790 = vpop.f32.mrf.mxu0
    %v791 = vadd.f32 %v762, %v790
    %792 = vmatmul.f32.gmra.mxu0 %v739
    %v793 = vpop.f32.mrf.mxu0
    %v794 = vadd.f32 %v765, %v793
    %795 = vmatmul.f32.gmra.mxu0 %v741
    %v796 = vpop.f32.mrf.mxu0
    %v797 = vadd.f32 %v768, %v796
    %798 = vmatmul.f32.gmra.mxu0 %v743
    %v799 = vpop.f32.mrf.mxu0
    %v800 = vadd.f32 %v771, %v799
    %801 = vdwg.mxu0
    %802 = vmatpush.msra.mxu0 %v669
    %803 = vmatpush.msra.mxu0 %v665
    %804 = vmatpush.msra.mxu0 %v661
    %805 = vmatpush.msra.mxu0 %v657
    %806 = vmatpush.msra.mxu0 %v653
    %807 = vmatpush.msra.mxu0 %v649
    %808 = vmatpush.msra.mxu0 %v645
    %809 = vmatpush.msra.mxu0 %v641
    %810 = vmatpush.msra.mxu0 %v637
    %811 = vmatpush.msra.mxu0 %v633
    %812 = vmatpush.msra.mxu0 %v629
    %813 = vmatpush.msra.mxu0 %v625
    %814 = vmatpush.msra.mxu0 %v621
    %815 = vmatpush.msra.mxu0 %v617
    %816 = vmatpush.msra.mxu0 %v613
    %817 = vmatpush.msra.mxu0 %v609
    %818 = vmatmul.f32.gmra.mxu0 %v736
    %v819 = vpop.f32.mrf.mxu0
    %v820 = vadd.f32 0.0, %v819
    %821 = vmatmul.f32.gmra.mxu0 %v738
    %v822 = vpop.f32.mrf.mxu0
    %v823 = vadd.f32 0.0, %v822
    %824 = vmatmul.f32.gmra.mxu0 %v740
    %v825 = vpop.f32.mrf.mxu0
    %v826 = vadd.f32 0.0, %v825
    %827 = vmatmul.f32.gmra.mxu0 %v742
    %v828 = vpop.f32.mrf.mxu0
    %v829 = vadd.f32 0.0, %v828
    %830 = vdwg.mxu0
    %831 = vmatpush.msra.mxu0 %v733
    %832 = vmatpush.msra.mxu0 %v729
    %833 = vmatpush.msra.mxu0 %v725
    %834 = vmatpush.msra.mxu0 %v721
    %835 = vmatpush.msra.mxu0 %v717
    %836 = vmatpush.msra.mxu0 %v713
    %837 = vmatpush.msra.mxu0 %v709
    %838 = vmatpush.msra.mxu0 %v705
    %839 = vmatpush.msra.mxu0 %v701
    %840 = vmatpush.msra.mxu0 %v697
    %841 = vmatpush.msra.mxu0 %v693
    %842 = vmatpush.msra.mxu0 %v689
    %843 = vmatpush.msra.mxu0 %v685
    %844 = vmatpush.msra.mxu0 %v681
    %845 = vmatpush.msra.mxu0 %v677
    %846 = vmatpush.msra.mxu0 %v673
    %847 = vmatmul.f32.gmra.mxu0 %v737
    %v848 = vpop.f32.mrf.mxu0
    %v849 = vadd.f32 %v820, %v848
    %850 = vmatmul.f32.gmra.mxu0 %v739
    %v851 = vpop.f32.mrf.mxu0
    %v852 = vadd.f32 %v823, %v851
    %853 = vmatmul.f32.gmra.mxu0 %v741
    %v854 = vpop.f32.mrf.mxu0
    %v855 = vadd.f32 %v826, %v854
    %856 = vmatmul.f32.gmra.mxu0 %v743
    %v857 = vpop.f32.mrf.mxu0
    %v858 = vadd.f32 %v829, %v857
    %859 = vdwg.mxu0
    %860 = vmatpush.msra.mxu0 %v670
    %861 = vmatpush.msra.mxu0 %v666
    %862 = vmatpush.msra.mxu0 %v662
    %863 = vmatpush.msra.mxu0 %v658
    %864 = vmatpush.msra.mxu0 %v654
    %865 = vmatpush.msra.mxu0 %v650
    %866 = vmatpush.msra.mxu0 %v646
    %867 = vmatpush.msra.mxu0 %v642
    %868 = vmatpush.msra.mxu0 %v638
    %869 = vmatpush.msra.mxu0 %v634
    %870 = vmatpush.msra.mxu0 %v630
    %871 = vmatpush.msra.mxu0 %v626
    %872 = vmatpush.msra.mxu0 %v622
    %873 = vmatpush.msra.mxu0 %v618
    %874 = vmatpush.msra.mxu0 %v614
    %875 = vmatpush.msra.mxu0 %v610
    %876 = vmatmul.f32.gmra.mxu0 %v736
    %v877 = vpop.f32.mrf.mxu0
    %v878 = vadd.f32 0.0, %v877
    %879 = vmatmul.f32.gmra.mxu0 %v738
    %v880 = vpop.f32.mrf.mxu0
    %v881 = vadd.f32 0.0, %v880
    %882 = vmatmul.f32.gmra.mxu0 %v740
    %v883 = vpop.f32.mrf.mxu0
    %v884 = vadd.f32 0.0, %v883
    %885 = vmatmul.f32.gmra.mxu0 %v742
    %v886 = vpop.f32.mrf.mxu0
    %v887 = vadd.f32 0.0, %v886
    %888 = vdwg.mxu0
    %889 = vmatpush.msra.mxu0 %v734
    %890 = vmatpush.msra.mxu0 %v730
    %891 = vmatpush.msra.mxu0 %v726
    %892 = vmatpush.msra.mxu0 %v722
    %893 = vmatpush.msra.mxu0 %v718
    %894 = vmatpush.msra.mxu0 %v714
    %895 = vmatpush.msra.mxu0 %v710
    %896 = vmatpush.msra.mxu0 %v706
    %897 = vmatpush.msra.mxu0 %v702
    %898 = vmatpush.msra.mxu0 %v698
    %899 = vmatpush.msra.mxu0 %v694
    %900 = vmatpush.msra.mxu0 %v690
    %901 = vmatpush.msra.mxu0 %v686
    %902 = vmatpush.msra.mxu0 %v682
    %903 = vmatpush.msra.mxu0 %v678
    %904 = vmatpush.msra.mxu0 %v674
    %905 = vmatmul.f32.gmra.mxu0 %v737
    %v906 = vpop.f32.mrf.mxu0
    %v907 = vadd.f32 %v878, %v906
    %908 = vmatmul.f32.gmra.mxu0 %v739
    %v909 = vpop.f32.mrf.mxu0
    %v910 = vadd.f32 %v881, %v909
    %911 = vmatmul.f32.gmra.mxu0 %v741
    %v912 = vpop.f32.mrf.mxu0
    %v913 = vadd.f32 %v884, %v912
    %914 = vmatmul.f32.gmra.mxu0 %v743
    %v915 = vpop.f32.mrf.mxu0
    %v916 = vadd.f32 %v887, %v915
    %917 = vdwg.mxu0
    %918 = vmatpush.msra.mxu0 %v671
    %919 = vmatpush.msra.mxu0 %v667
    %920 = vmatpush.msra.mxu0 %v663
    %921 = vmatpush.msra.mxu0 %v659
    %922 = vmatpush.msra.mxu0 %v655
    %923 = vmatpush.msra.mxu0 %v651
    %924 = vmatpush.msra.mxu0 %v647
    %925 = vmatpush.msra.mxu0 %v643
    %926 = vmatpush.msra.mxu0 %v639
    %927 = vmatpush.msra.mxu0 %v635
    %928 = vmatpush.msra.mxu0 %v631
    %929 = vmatpush.msra.mxu0 %v627
    %930 = vmatpush.msra.mxu0 %v623
    %931 = vmatpush.msra.mxu0 %v619
    %932 = vmatpush.msra.mxu0 %v615
    %933 = vmatpush.msra.mxu0 %v611
    %934 = vmatmul.f32.gmra.mxu0 %v736
    %v935 = vpop.f32.mrf.mxu0
    %v936 = vadd.f32 0.0, %v935
    %937 = vmatmul.f32.gmra.mxu0 %v738
    %v938 = vpop.f32.mrf.mxu0
    %v939 = vadd.f32 0.0, %v938
    %940 = vmatmul.f32.gmra.mxu0 %v740
    %v941 = vpop.f32.mrf.mxu0
    %v942 = vadd.f32 0.0, %v941
    %943 = vmatmul.f32.gmra.mxu0 %v742
    %v944 = vpop.f32.mrf.mxu0
    %v945 = vadd.f32 0.0, %v944
    %946 = vdwg.mxu0
    %947 = vmatpush.msra.mxu0 %v735
    %948 = vmatpush.msra.mxu0 %v731
    %949 = vmatpush.msra.mxu0 %v727
    %950 = vmatpush.msra.mxu0 %v723
    %951 = vmatpush.msra.mxu0 %v719
    %952 = vmatpush.msra.mxu0 %v715
    %953 = vmatpush.msra.mxu0 %v711
    %954 = vmatpush.msra.mxu0 %v707
    %955 = vmatpush.msra.mxu0 %v703
    %956 = vmatpush.msra.mxu0 %v699
    %957 = vmatpush.msra.mxu0 %v695
    %958 = vmatpush.msra.mxu0 %v691
    %959 = vmatpush.msra.mxu0 %v687
    %960 = vmatpush.msra.mxu0 %v683
    %961 = vmatpush.msra.mxu0 %v679
    %962 = vmatpush.msra.mxu0 %v675
    %963 = vmatmul.f32.gmra.mxu0 %v737
    %v964 = vpop.f32.mrf.mxu0
    %v965 = vadd.f32 %v936, %v964
    %966 = vmatmul.f32.gmra.mxu0 %v739
    %v967 = vpop.f32.mrf.mxu0
    %v968 = vadd.f32 %v939, %v967
    %969 = vmatmul.f32.gmra.mxu0 %v741
    %v970 = vpop.f32.mrf.mxu0
    %v971 = vadd.f32 %v942, %v970
    %972 = vmatmul.f32.gmra.mxu0 %v743
    %v973 = vpop.f32.mrf.mxu0
    %v974 = vadd.f32 %v945, %v973
    %975 = vdwg.mxu0
    %v976 = vmul.f32 %v791, %v791
    %v977 = vmul.f32 %v849, %v849
    %v978 = vmul.f32 %v907, %v907
    %v979 = vmul.f32 %v965, %v965
    %v980 = vmul.f32 %v794, %v794
    %v981 = vmul.f32 %v852, %v852
    %v982 = vmul.f32 %v910, %v910
    %v983 = vmul.f32 %v968, %v968
    %v984 = vmul.f32 %v797, %v797
    %v985 = vmul.f32 %v855, %v855
    %v986 = vmul.f32 %v913, %v913
    %v987 = vmul.f32 %v971, %v971
    %v988 = vmul.f32 %v800, %v800
    %v989 = vmul.f32 %v858, %v858
    %v990 = vmul.f32 %v916, %v916
    %v991 = vmul.f32 %v974, %v974
    %v992 = vadd.f32 %v976, %v980
    %v993 = vadd.f32 %v992, %v984
    %v994 = vadd.f32 %v993, %v988
    %v995 = vrot.slane %v994, 4
    %v996 = vadd.f32 %v994, %v995
    %v997 = vrot.slane %v996, 2
    %v998 = vadd.f32 %v996, %v997
    %v999 = vrot.slane %v998, 1
    %v1000 = vadd.f32 %v998, %v999
    %v1001 = vadd.f32 %v977, %v981
    %v1002 = vadd.f32 %v1001, %v985
    %v1003 = vadd.f32 %v1002, %v989
    %v1004 = vrot.slane %v1003, 4
    %v1005 = vadd.f32 %v1003, %v1004
    %v1006 = vrot.slane %v1005, 2
    %v1007 = vadd.f32 %v1005, %v1006
    %v1008 = vrot.slane %v1007, 1
    %v1009 = vadd.f32 %v1007, %v1008
    %v1010 = vadd.f32 %v978, %v982
    %v1011 = vadd.f32 %v1010, %v986
    %v1012 = vadd.f32 %v1011, %v990
    %v1013 = vrot.slane %v1012, 4
    %v1014 = vadd.f32 %v1012, %v1013
    %v1015 = vrot.slane %v1014, 2
    %v1016 = vadd.f32 %v1014, %v1015
    %v1017 = vrot.slane %v1016, 1
    %v1018 = vadd.f32 %v1016, %v1017
    %v1019 = vadd.f32 %v979, %v983
    %v1020 = vadd.f32 %v1019, %v987
    %v1021 = vadd.f32 %v1020, %v991
    %v1022 = vrot.slane %v1021, 4
    %v1023 = vadd.f32 %v1021, %v1022
    %v1024 = vrot.slane %v1023, 2
    %v1025 = vadd.f32 %v1023, %v1024
    %v1026 = vrot.slane %v1025, 1
    %v1027 = vadd.f32 %v1025, %v1026
    %v1028 = vrsqrt.pop %v1000
    %v1029 = vmul.f32 %v1028, %v1000
    %v1030 = vmul.f32 %v1029, %v1028
    %v1031 = vmul.f32 0.5, %v1030
    %v1032 = vsub.f32 1.5, %v1031
    %v1033 = vmul.f32 %v1028, %v1032
    %v1034 = vmul.f32 %v1000, %v1033
    %vm1035 = vcmp.eq.f32.partialorder %v1000, inf
    %v1036 = vsel %vm1035, %v1000, %v1034
    %vm1037 = vcmp.eq.f32.partialorder %v1000, 0.0
    %v1038 = vand.u32 %v1000, 2147483648
    %v1039 = vsel %vm1037, %v1038, %v1036
    %v1040 = vrsqrt.pop %v1009
    %v1041 = vmul.f32 %v1040, %v1009
    %v1042 = vmul.f32 %v1041, %v1040
    %v1043 = vmul.f32 0.5, %v1042
    %v1044 = vsub.f32 1.5, %v1043
    %v1045 = vmul.f32 %v1040, %v1044
    %v1046 = vmul.f32 %v1009, %v1045
    %vm1047 = vcmp.eq.f32.partialorder %v1009, inf
    %v1048 = vsel %vm1047, %v1009, %v1046
    %vm1049 = vcmp.eq.f32.partialorder %v1009, 0.0
    %v1050 = vand.u32 %v1009, 2147483648
    %v1051 = vsel %vm1049, %v1050, %v1048
    %v1052 = vrsqrt.pop %v1018
    %v1053 = vmul.f32 %v1052, %v1018
    %v1054 = vmul.f32 %v1053, %v1052
    %v1055 = vmul.f32 0.5, %v1054
    %v1056 = vsub.f32 1.5, %v1055
    %v1057 = vmul.f32 %v1052, %v1056
    %v1058 = vmul.f32 %v1018, %v1057
    %vm1059 = vcmp.eq.f32.partialorder %v1018, inf
    %v1060 = vsel %vm1059, %v1018, %v1058
    %vm1061 = vcmp.eq.f32.partialorder %v1018, 0.0
    %v1062 = vand.u32 %v1018, 2147483648
    %v1063 = vsel %vm1061, %v1062, %v1060
    %v1064 = vrsqrt.pop %v1027
    %v1065 = vmul.f32 %v1064, %v1027
    %v1066 = vmul.f32 %v1065, %v1064
    %v1067 = vmul.f32 0.5, %v1066
    %v1068 = vsub.f32 1.5, %v1067
    %v1069 = vmul.f32 %v1064, %v1068
    %v1070 = vmul.f32 %v1027, %v1069
    %vm1071 = vcmp.eq.f32.partialorder %v1027, inf
    %v1072 = vsel %vm1071, %v1027, %v1070
    %vm1073 = vcmp.eq.f32.partialorder %v1027, 0.0
    %v1074 = vand.u32 %v1027, 2147483648
    %v1075 = vsel %vm1073, %v1074, %v1072
    %s1076 = sld [smem:[#allocation2]]
    %v1077 = vstv %s1076
    %v1078 = vmul.f32 %v1039, %v1077
    %v1079 = vmul.f32 %v1051, %v1077
    %v1080 = vmul.f32 %v1063, %v1077
    %v1081 = vmul.f32 %v1075, %v1077
    %s1082 = sld [smem:[#allocation3]]
    %v1083 = vstv %s1082
    %v1084 = vadd.f32 %v1078, %v1083
    %v1085 = vadd.f32 %v1079, %v1083
    %v1086 = vadd.f32 %v1080, %v1083
    %v1087 = vadd.f32 %v1081, %v1083
    %v1092 = vrot.slane %v1085, 7
    %v1093 = vrot.slane %v1086, 6
    %v1094 = vrot.slane %v1087, 5
    %vm1095 = vcmask 1040384
    %v1096 = vsel %vm1095, %v1084, %v1092
    %vm1097 = vcmask 1042434
    %v1098 = vsel %vm1097, %v1093, %v1094
    %vm1099 = vcmask 1041408
    %v1100 = vsel %vm1099, %v1096, %v1098
    %v1102 = vlaneseq
    %vm1103 = vcmp.ge.s32.totalorder %v1102, 0
    %vm1104 = vcmp.lt.s32.totalorder %v1102, 512
    %vm1105 = vmand %vm1103, %vm1104
    %1106 = vst.msk [vmem:[#allocation9] sm:$0xf] %vm1105, %v1100
    // Predicated region
    $region30: #{tpu_custom_call.1} parent=1 // pred_check
      _
    $region31: #{tpu_custom_call.1} parent=1 // pred_check_branch
      %1108 = sbr.rel (0) target = $region33
    $region32: #{tpu_custom_call.1} parent=1 // pred_region
      %1110 = vsyncadd [#allocation6], 0
      %s1112 = sshll.u32 [#allocation9], 4
      %s1113 = int_to_ptr.vmem [resolvable:$true] %s1112
      %s1114 = sshll.u32 %s5, 4
      %s1115 = int_to_ptr.hbm [resolvable:$true] %s1114
      %1117 = dma.vmem_to_hbm [thread:$0]  %s1113, 64, %s1115, [#allocation6]
    $region33: #{tpu_custom_call.1} parent=1 // pred_fallthru
      _
    // Predicated region
    $region34: #{tpu_custom_call.1} parent=1 // pred_check
      _
    $region35: #{tpu_custom_call.1} parent=1 // pred_check_branch
      %1119 = sbr.rel (0) target = $region37
    $region36: #{tpu_custom_call.1} parent=1 // pred_region
      %1121 = dma.done [#allocation6], 64
    $region37: #{tpu_custom_call.1} parent=1 // pred_fallthru
      _
    %1122 = vsyncpa [#allocation5], 1
    %1123 = vsyncpa [#allocation8], 1
    %1124 = vsyncpa [#allocation6], 1

// kernel: tpu_custom_call.1
$region0: #{tpu_custom_call.1}
  #allocation0 [shape = 'u32[]', space=smem, size = 0x4, offset = 0x4, fixed_abs, tag = 'smem constant byte address 0x4 - core index']
  #allocation1 [shape = 'u32[72,128]{1,0:T(1,128)}', space=vmem, size = 0x9000, scoped, tag = 'internal scratch']
  #allocation2 [shape = 'f32[1,1]{1,0:T(1,128)S(6)}', space=smem, size = 0x200, scoped, tag = 'scoped memory for tpu_custom_call.1']
  #allocation3 [shape = 'f32[1,1]{1,0:T(1,128)S(6)}', space=smem, size = 0x200, scoped, tag = 'scoped memory for tpu_custom_call.1']
  %s0 = inlined_call_operand.vmem [shape: s32[1,512], index: 0, kind: input, shape index: {}]
  %s1 = inlined_call_operand.hbm [shape: s32[1,512], index: 1, kind: input, shape index: {}]
  %s2 = inlined_call_operand.hbm [shape: f32[32,256], index: 2, kind: input, shape index: {}]
  %s3 = inlined_call_operand.<no memory space> [shape: f32[1,1], index: 3, kind: input, shape index: {}]
  %s4 = inlined_call_operand.<no memory space> [shape: f32[1,1], index: 4, kind: input, shape index: {}]
  %s5 = inlined_call_operand.hbm [shape: f32[1,512], index: 5, kind: output, shape index: {}]
  %s6 = sld [smem:[#allocation0]]
  $region38: #{tpu_custom_call.1} parent=0
    _
  %s8 = ssub.s32 1, %s6
  %s9 = scalar_select 0, %s8, %s6
  %10 = sst [smem:[#allocation2]] %s3
  %11 = sst [smem:[#allocation3]] %s4
  $region1: #{tpu_custom_call.1} parent=0
    #allocation4 [shape = 'u8[2048]{0}', space=vmem, size = 0x800, scoped, tag = 'input window, operand 1, single buffered']
    #allocation5 [shape = 's32[1]{0}', space=sflag, size = 0x4, scoped, tag = 'scoped memory for tpu_custom_call.1']
    #allocation6 [shape = 's32[1]{0}', space=sflag, size = 0x4, scoped, tag = 'scoped memory for tpu_custom_call.1']
    #allocation7 [shape = 'u8[32768]{0}', space=vmem, size = 0x8000, scoped, tag = 'input window, operand 2, single buffered']
    #allocation8 [shape = 's32[1]{0}', space=sflag, size = 0x4, scoped, tag = 'scoped memory for tpu_custom_call.1']
    #allocation9 [shape = 'u8[2048]{0}', space=vmem, size = 0x800, scoped, tag = 'output window, operand 0, single buffered']
    %12 = vsyncpa [#allocation5], 0
    %13 = vsyncpa [#allocation8], 0
    %14 = vsyncpa [#allocation6], 0
    // Predicated region
    $region2: #{tpu_custom_call.1} parent=1 // pred_check
      _
    $region3: #{tpu_custom_call.1} parent=1 // pred_check_branch
      %16 = sbr.rel (0) target = $region5
    $region4: #{tpu_custom_call.1} parent=1 // pred_region
      _
    $region5: #{tpu_custom_call.1} parent=1 // pred_fallthru
      _
    // Predicated region
    $region6: #{tpu_custom_call.1} parent=1 // pred_check
      _
    $region7: #{tpu_custom_call.1} parent=1 // pred_check_branch
      %18 = sbr.rel (0) target = $region9
    $region8: #{tpu_custom_call.1} parent=1 // pred_region
      %20 = vsyncadd [#allocation5], 0
      %s22 = sshll.u32 %s1, 4
      %s23 = int_to_ptr.hbm [resolvable:$true] %s22
      %s24 = sshll.u32 [#allocation4], 4
      %s25 = int_to_ptr.vmem [resolvable:$true] %s24
      %27 = dma.hbm_to_vmem [thread:$0]  %s23, 64, %s25, [#allocation5]
    $region9: #{tpu_custom_call.1} parent=1 // pred_fallthru
      _
    // Predicated region
    $region10: #{tpu_custom_call.1} parent=1 // pred_check
      _
    $region11: #{tpu_custom_call.1} parent=1 // pred_check_branch
      %29 = sbr.rel (0) target = $region13
    $region12: #{tpu_custom_call.1} parent=1 // pred_region
      %31 = vsyncadd [#allocation8], 0
      %s32 = sshll.u32 %s2, 4
      %s33 = int_to_ptr.hbm [resolvable:$true] %s32
      %s34 = sshll.u32 [#allocation7], 4
      %s35 = int_to_ptr.vmem [resolvable:$true] %s34
      %40 = dma.hbm_to_vmem [thread:$0]  %s33, 1024, %s35, [#allocation8], 256, 256, 16
    $region13: #{tpu_custom_call.1} parent=1 // pred_fallthru
      _
    // Predicated region
    $region14: #{tpu_custom_call.1} parent=1 // pred_check
      _
    $region15: #{tpu_custom_call.1} parent=1 // pred_check_branch
      %42 = sbr.rel (0) target = $region17
    $region16: #{tpu_custom_call.1} parent=1 // pred_region
      _
    $region17: #{tpu_custom_call.1} parent=1 // pred_fallthru
      _
    // Predicated region
    $region18: #{tpu_custom_call.1} parent=1 // pred_check
      _
    $region19: #{tpu_custom_call.1} parent=1 // pred_check_branch
      %44 = sbr.rel (0) target = $region21
    $region20: #{tpu_custom_call.1} parent=1 // pred_region
      _
    $region21: #{tpu_custom_call.1} parent=1 // pred_fallthru
      _
    // Predicated region
    $region22: #{tpu_custom_call.1} parent=1 // pred_check
      _
    $region23: #{tpu_custom_call.1} parent=1 // pred_check_branch
      %46 = sbr.rel (0) target = $region25
    $region24: #{tpu_custom_call.1} parent=1 // pred_region
      %48 = dma.done [#allocation5], 64
    $region25: #{tpu_custom_call.1} parent=1 // pred_fallthru
      _
    // Predicated region
    $region26: #{tpu_custom_call.1} parent=1 // pred_check
      _
    $region27: #{tpu_custom_call.1} parent=1 // pred_check_branch
      %50 = sbr.rel (0) target = $region29
    $region28: #{tpu_custom_call.1} parent=1 // pred_region
      %52 = dma.done [#allocation8], 1024
    $region29: #{tpu_custom_call.1} parent=1 // pred_fallthru
      _
    %v53 = vld [vmem:[%s0] sm:$0xf]
    %v54 = vld [vmem:[#allocation4] sm:$0xf]
    %v55 = vlaneseq
    %v56 = vshrl.u32 %v55, 7
    %v57 = vadd.s32 %v56, 8
    %v58 = vadd.s32 %v56, 16
    %v59 = vadd.s32 %v56, 24
    %v60 = vadd.s32 %v56, 32
    %v61 = vadd.s32 %v56, 40
    %v62 = vadd.s32 %v56, 48
    %v63 = vadd.s32 %v56, 56
    %v64 = vadd.s32 %v56, 64
    %v65 = vadd.s32 %v56, 72
    %v66 = vadd.s32 %v56, 80
    %v67 = vadd.s32 %v56, 88
    %v68 = vadd.s32 %v56, 96
    %v69 = vadd.s32 %v56, 104
    %v70 = vadd.s32 %v56, 112
    %v71 = vadd.s32 %v56, 120
    %v72 = vadd.s32 %v56, 128
    %v73 = vadd.s32 %v56, 136
    %v74 = vadd.s32 %v56, 144
    %v75 = vadd.s32 %v56, 152
    %v76 = vadd.s32 %v56, 160
    %v77 = vadd.s32 %v56, 168
    %v78 = vadd.s32 %v56, 176
    %v79 = vadd.s32 %v56, 184
    %v80 = vadd.s32 %v56, 192
    %v81 = vadd.s32 %v56, 200
    %v82 = vadd.s32 %v56, 208
    %v83 = vadd.s32 %v56, 216
    %v84 = vadd.s32 %v56, 224
    %v85 = vadd.s32 %v56, 232
    %v86 = vadd.s32 %v56, 240
    %v87 = vadd.s32 %v56, 248
    %v88 = vperm.slane %v53, 0
    %v89 = vperm.slane %v53, 1
    %v90 = vperm.slane %v53, 2
    %v91 = vperm.slane %v53, 3
    %vm92 = vcmp.eq.s32.totalorder %v56, %v88
    %vm93 = vcmp.eq.s32.totalorder %v56, %v89
    %vm94 = vcmp.eq.s32.totalorder %v56, %v90
    %vm95 = vcmp.eq.s32.totalorder %v56, %v91
    %vm96 = vcmp.eq.s32.totalorder %v57, %v88
    %vm97 = vcmp.eq.s32.totalorder %v57, %v89
    %vm98 = vcmp.eq.s32.totalorder %v57, %v90
    %vm99 = vcmp.eq.s32.totalorder %v57, %v91
    %vm100 = vcmp.eq.s32.totalorder %v58, %v88
    %vm101 = vcmp.eq.s32.totalorder %v58, %v89
    %vm102 = vcmp.eq.s32.totalorder %v58, %v90
    %vm103 = vcmp.eq.s32.totalorder %v58, %v91
    %vm104 = vcmp.eq.s32.totalorder %v59, %v88
    %vm105 = vcmp.eq.s32.totalorder %v59, %v89
    %vm106 = vcmp.eq.s32.totalorder %v59, %v90
    %vm107 = vcmp.eq.s32.totalorder %v59, %v91
    %vm108 = vcmp.eq.s32.totalorder %v60, %v88
    %vm109 = vcmp.eq.s32.totalorder %v60, %v89
    %vm110 = vcmp.eq.s32.totalorder %v60, %v90
    %vm111 = vcmp.eq.s32.totalorder %v60, %v91
    %vm112 = vcmp.eq.s32.totalorder %v61, %v88
    %vm113 = vcmp.eq.s32.totalorder %v61, %v89
    %vm114 = vcmp.eq.s32.totalorder %v61, %v90
    %vm115 = vcmp.eq.s32.totalorder %v61, %v91
    %vm116 = vcmp.eq.s32.totalorder %v62, %v88
    %vm117 = vcmp.eq.s32.totalorder %v62, %v89
    %vm118 = vcmp.eq.s32.totalorder %v62, %v90
    %vm119 = vcmp.eq.s32.totalorder %v62, %v91
    %vm120 = vcmp.eq.s32.totalorder %v63, %v88
    %vm121 = vcmp.eq.s32.totalorder %v63, %v89
    %vm122 = vcmp.eq.s32.totalorder %v63, %v90
    %vm123 = vcmp.eq.s32.totalorder %v63, %v91
    %vm124 = vcmp.eq.s32.totalorder %v64, %v88
    %vm125 = vcmp.eq.s32.totalorder %v64, %v89
    %vm126 = vcmp.eq.s32.totalorder %v64, %v90
    %vm127 = vcmp.eq.s32.totalorder %v64, %v91
    %vm128 = vcmp.eq.s32.totalorder %v65, %v88
    %vm129 = vcmp.eq.s32.totalorder %v65, %v89
    %vm130 = vcmp.eq.s32.totalorder %v65, %v90
    %vm131 = vcmp.eq.s32.totalorder %v65, %v91
    %vm132 = vcmp.eq.s32.totalorder %v66, %v88
    %vm133 = vcmp.eq.s32.totalorder %v66, %v89
    %vm134 = vcmp.eq.s32.totalorder %v66, %v90
    %vm135 = vcmp.eq.s32.totalorder %v66, %v91
    %vm136 = vcmp.eq.s32.totalorder %v67, %v88
    %vm137 = vcmp.eq.s32.totalorder %v67, %v89
    %vm138 = vcmp.eq.s32.totalorder %v67, %v90
    %vm139 = vcmp.eq.s32.totalorder %v67, %v91
    %vm140 = vcmp.eq.s32.totalorder %v68, %v88
    %vm141 = vcmp.eq.s32.totalorder %v68, %v89
    %vm142 = vcmp.eq.s32.totalorder %v68, %v90
    %vm143 = vcmp.eq.s32.totalorder %v68, %v91
    %vm144 = vcmp.eq.s32.totalorder %v69, %v88
    %vm145 = vcmp.eq.s32.totalorder %v69, %v89
    %vm146 = vcmp.eq.s32.totalorder %v69, %v90
    %vm147 = vcmp.eq.s32.totalorder %v69, %v91
    %vm148 = vcmp.eq.s32.totalorder %v70, %v88
    %vm149 = vcmp.eq.s32.totalorder %v70, %v89
    %vm150 = vcmp.eq.s32.totalorder %v70, %v90
    %vm151 = vcmp.eq.s32.totalorder %v70, %v91
    %vm152 = vcmp.eq.s32.totalorder %v71, %v88
    %vm153 = vcmp.eq.s32.totalorder %v71, %v89
    %vm154 = vcmp.eq.s32.totalorder %v71, %v90
    %vm155 = vcmp.eq.s32.totalorder %v71, %v91
    %vm156 = vcmp.eq.s32.totalorder %v72, %v88
    %vm157 = vcmp.eq.s32.totalorder %v72, %v89
    %vm158 = vcmp.eq.s32.totalorder %v72, %v90
    %vm159 = vcmp.eq.s32.totalorder %v72, %v91
    %vm160 = vcmp.eq.s32.totalorder %v73, %v88
    %vm161 = vcmp.eq.s32.totalorder %v73, %v89
    %vm162 = vcmp.eq.s32.totalorder %v73, %v90
    %vm163 = vcmp.eq.s32.totalorder %v73, %v91
    %vm164 = vcmp.eq.s32.totalorder %v74, %v88
    %vm165 = vcmp.eq.s32.totalorder %v74, %v89
    %vm166 = vcmp.eq.s32.totalorder %v74, %v90
    %vm167 = vcmp.eq.s32.totalorder %v74, %v91
    %vm168 = vcmp.eq.s32.totalorder %v75, %v88
    %vm169 = vcmp.eq.s32.totalorder %v75, %v89
    %vm170 = vcmp.eq.s32.totalorder %v75, %v90
    %vm171 = vcmp.eq.s32.totalorder %v75, %v91
    %vm172 = vcmp.eq.s32.totalorder %v76, %v88
    %vm173 = vcmp.eq.s32.totalorder %v76, %v89
    %vm174 = vcmp.eq.s32.totalorder %v76, %v90
    %vm175 = vcmp.eq.s32.totalorder %v76, %v91
    %vm176 = vcmp.eq.s32.totalorder %v77, %v88
    %vm177 = vcmp.eq.s32.totalorder %v77, %v89
    %vm178 = vcmp.eq.s32.totalorder %v77, %v90
    %vm179 = vcmp.eq.s32.totalorder %v77, %v91
    %vm180 = vcmp.eq.s32.totalorder %v78, %v88
    %vm181 = vcmp.eq.s32.totalorder %v78, %v89
    %vm182 = vcmp.eq.s32.totalorder %v78, %v90
    %vm183 = vcmp.eq.s32.totalorder %v78, %v91
    %vm184 = vcmp.eq.s32.totalorder %v79, %v88
    %vm185 = vcmp.eq.s32.totalorder %v79, %v89
    %vm186 = vcmp.eq.s32.totalorder %v79, %v90
    %vm187 = vcmp.eq.s32.totalorder %v79, %v91
    %vm188 = vcmp.eq.s32.totalorder %v80, %v88
    %vm189 = vcmp.eq.s32.totalorder %v80, %v89
    %vm190 = vcmp.eq.s32.totalorder %v80, %v90
    %vm191 = vcmp.eq.s32.totalorder %v80, %v91
    %vm192 = vcmp.eq.s32.totalorder %v81, %v88
    %vm193 = vcmp.eq.s32.totalorder %v81, %v89
    %vm194 = vcmp.eq.s32.totalorder %v81, %v90
    %vm195 = vcmp.eq.s32.totalorder %v81, %v91
    %vm196 = vcmp.eq.s32.totalorder %v82, %v88
    %vm197 = vcmp.eq.s32.totalorder %v82, %v89
    %vm198 = vcmp.eq.s32.totalorder %v82, %v90
    %vm199 = vcmp.eq.s32.totalorder %v82, %v91
    %vm200 = vcmp.eq.s32.totalorder %v83, %v88
    %vm201 = vcmp.eq.s32.totalorder %v83, %v89
    %vm202 = vcmp.eq.s32.totalorder %v83, %v90
    %vm203 = vcmp.eq.s32.totalorder %v83, %v91
    %vm204 = vcmp.eq.s32.totalorder %v84, %v88
    %vm205 = vcmp.eq.s32.totalorder %v84, %v89
    %vm206 = vcmp.eq.s32.totalorder %v84, %v90
    %vm207 = vcmp.eq.s32.totalorder %v84, %v91
    %vm208 = vcmp.eq.s32.totalorder %v85, %v88
    %vm209 = vcmp.eq.s32.totalorder %v85, %v89
    %vm210 = vcmp.eq.s32.totalorder %v85, %v90
    %vm211 = vcmp.eq.s32.totalorder %v85, %v91
    %vm212 = vcmp.eq.s32.totalorder %v86, %v88
    %vm213 = vcmp.eq.s32.totalorder %v86, %v89
    %vm214 = vcmp.eq.s32.totalorder %v86, %v90
    %vm215 = vcmp.eq.s32.totalorder %v86, %v91
    %vm216 = vcmp.eq.s32.totalorder %v87, %v88
    %vm217 = vcmp.eq.s32.totalorder %v87, %v89
    %vm218 = vcmp.eq.s32.totalorder %v87, %v90
    %vm219 = vcmp.eq.s32.totalorder %v87, %v91
    %v220 = vperm.slane %v54, 0
    %v221 = vperm.slane %v54, 1
    %v222 = vperm.slane %v54, 2
    %v223 = vperm.slane %v54, 3
    %vm224 = vcmp.eq.s32.totalorder %v56, %v220
    %vm225 = vcmp.eq.s32.totalorder %v56, %v221
    %vm226 = vcmp.eq.s32.totalorder %v56, %v222
    %vm227 = vcmp.eq.s32.totalorder %v56, %v223
    %vm228 = vcmp.eq.s32.totalorder %v57, %v220
    %vm229 = vcmp.eq.s32.totalorder %v57, %v221
    %vm230 = vcmp.eq.s32.totalorder %v57, %v222
    %vm231 = vcmp.eq.s32.totalorder %v57, %v223
    %vm232 = vcmp.eq.s32.totalorder %v58, %v220
    %vm233 = vcmp.eq.s32.totalorder %v58, %v221
    %vm234 = vcmp.eq.s32.totalorder %v58, %v222
    %vm235 = vcmp.eq.s32.totalorder %v58, %v223
    %vm236 = vcmp.eq.s32.totalorder %v59, %v220
    %vm237 = vcmp.eq.s32.totalorder %v59, %v221
    %vm238 = vcmp.eq.s32.totalorder %v59, %v222
    %vm239 = vcmp.eq.s32.totalorder %v59, %v223
    %vm240 = vcmp.eq.s32.totalorder %v60, %v220
    %vm241 = vcmp.eq.s32.totalorder %v60, %v221
    %vm242 = vcmp.eq.s32.totalorder %v60, %v222
    %vm243 = vcmp.eq.s32.totalorder %v60, %v223
    %vm244 = vcmp.eq.s32.totalorder %v61, %v220
    %vm245 = vcmp.eq.s32.totalorder %v61, %v221
    %vm246 = vcmp.eq.s32.totalorder %v61, %v222
    %vm247 = vcmp.eq.s32.totalorder %v61, %v223
    %vm248 = vcmp.eq.s32.totalorder %v62, %v220
    %vm249 = vcmp.eq.s32.totalorder %v62, %v221
    %vm250 = vcmp.eq.s32.totalorder %v62, %v222
    %vm251 = vcmp.eq.s32.totalorder %v62, %v223
    %vm252 = vcmp.eq.s32.totalorder %v63, %v220
    %vm253 = vcmp.eq.s32.totalorder %v63, %v221
    %vm254 = vcmp.eq.s32.totalorder %v63, %v222
    %vm255 = vcmp.eq.s32.totalorder %v63, %v223
    %vm256 = vcmp.eq.s32.totalorder %v64, %v220
    %vm257 = vcmp.eq.s32.totalorder %v64, %v221
    %vm258 = vcmp.eq.s32.totalorder %v64, %v222
    %vm259 = vcmp.eq.s32.totalorder %v64, %v223
    %vm260 = vcmp.eq.s32.totalorder %v65, %v220
    %vm261 = vcmp.eq.s32.totalorder %v65, %v221
    %vm262 = vcmp.eq.s32.totalorder %v65, %v222
    %vm263 = vcmp.eq.s32.totalorder %v65, %v223
    %vm264 = vcmp.eq.s32.totalorder %v66, %v220
    %vm265 = vcmp.eq.s32.totalorder %v66, %v221
    %vm266 = vcmp.eq.s32.totalorder %v66, %v222
    %vm267 = vcmp.eq.s32.totalorder %v66, %v223
    %vm268 = vcmp.eq.s32.totalorder %v67, %v220
    %vm269 = vcmp.eq.s32.totalorder %v67, %v221
    %vm270 = vcmp.eq.s32.totalorder %v67, %v222
    %vm271 = vcmp.eq.s32.totalorder %v67, %v223
    %vm272 = vcmp.eq.s32.totalorder %v68, %v220
    %vm273 = vcmp.eq.s32.totalorder %v68, %v221
    %vm274 = vcmp.eq.s32.totalorder %v68, %v222
    %vm275 = vcmp.eq.s32.totalorder %v68, %v223
    %vm276 = vcmp.eq.s32.totalorder %v69, %v220
    %vm277 = vcmp.eq.s32.totalorder %v69, %v221
    %vm278 = vcmp.eq.s32.totalorder %v69, %v222
    %vm279 = vcmp.eq.s32.totalorder %v69, %v223
    %vm280 = vcmp.eq.s32.totalorder %v70, %v220
    %vm281 = vcmp.eq.s32.totalorder %v70, %v221
    %vm282 = vcmp.eq.s32.totalorder %v70, %v222
    %vm283 = vcmp.eq.s32.totalorder %v70, %v223
    %vm284 = vcmp.eq.s32.totalorder %v71, %v220
    %vm285 = vcmp.eq.s32.totalorder %v71, %v221
    %vm286 = vcmp.eq.s32.totalorder %v71, %v222
    %vm287 = vcmp.eq.s32.totalorder %v71, %v223
    %vm288 = vcmp.eq.s32.totalorder %v72, %v220
    %vm289 = vcmp.eq.s32.totalorder %v72, %v221
    %vm290 = vcmp.eq.s32.totalorder %v72, %v222
    %vm291 = vcmp.eq.s32.totalorder %v72, %v223
    %vm292 = vcmp.eq.s32.totalorder %v73, %v220
    %vm293 = vcmp.eq.s32.totalorder %v73, %v221
    %vm294 = vcmp.eq.s32.totalorder %v73, %v222
    %vm295 = vcmp.eq.s32.totalorder %v73, %v223
    %vm296 = vcmp.eq.s32.totalorder %v74, %v220
    %vm297 = vcmp.eq.s32.totalorder %v74, %v221
    %vm298 = vcmp.eq.s32.totalorder %v74, %v222
    %vm299 = vcmp.eq.s32.totalorder %v74, %v223
    %vm300 = vcmp.eq.s32.totalorder %v75, %v220
    %vm301 = vcmp.eq.s32.totalorder %v75, %v221
    %vm302 = vcmp.eq.s32.totalorder %v75, %v222
    %vm303 = vcmp.eq.s32.totalorder %v75, %v223
    %vm304 = vcmp.eq.s32.totalorder %v76, %v220
    %vm305 = vcmp.eq.s32.totalorder %v76, %v221
    %vm306 = vcmp.eq.s32.totalorder %v76, %v222
    %vm307 = vcmp.eq.s32.totalorder %v76, %v223
    %vm308 = vcmp.eq.s32.totalorder %v77, %v220
    %vm309 = vcmp.eq.s32.totalorder %v77, %v221
    %vm310 = vcmp.eq.s32.totalorder %v77, %v222
    %vm311 = vcmp.eq.s32.totalorder %v77, %v223
    %vm312 = vcmp.eq.s32.totalorder %v78, %v220
    %vm313 = vcmp.eq.s32.totalorder %v78, %v221
    %vm314 = vcmp.eq.s32.totalorder %v78, %v222
    %vm315 = vcmp.eq.s32.totalorder %v78, %v223
    %vm316 = vcmp.eq.s32.totalorder %v79, %v220
    %vm317 = vcmp.eq.s32.totalorder %v79, %v221
    %vm318 = vcmp.eq.s32.totalorder %v79, %v222
    %vm319 = vcmp.eq.s32.totalorder %v79, %v223
    %vm320 = vcmp.eq.s32.totalorder %v80, %v220
    %vm321 = vcmp.eq.s32.totalorder %v80, %v221
    %vm322 = vcmp.eq.s32.totalorder %v80, %v222
    %vm323 = vcmp.eq.s32.totalorder %v80, %v223
    %vm324 = vcmp.eq.s32.totalorder %v81, %v220
    %vm325 = vcmp.eq.s32.totalorder %v81, %v221
    %vm326 = vcmp.eq.s32.totalorder %v81, %v222
    %vm327 = vcmp.eq.s32.totalorder %v81, %v223
    %vm328 = vcmp.eq.s32.totalorder %v82, %v220
    %vm329 = vcmp.eq.s32.totalorder %v82, %v221
    %vm330 = vcmp.eq.s32.totalorder %v82, %v222
    %vm331 = vcmp.eq.s32.totalorder %v82, %v223
    %vm332 = vcmp.eq.s32.totalorder %v83, %v220
    %vm333 = vcmp.eq.s32.totalorder %v83, %v221
    %vm334 = vcmp.eq.s32.totalorder %v83, %v222
    %vm335 = vcmp.eq.s32.totalorder %v83, %v223
    %vm336 = vcmp.eq.s32.totalorder %v84, %v220
    %vm337 = vcmp.eq.s32.totalorder %v84, %v221
    %vm338 = vcmp.eq.s32.totalorder %v84, %v222
    %vm339 = vcmp.eq.s32.totalorder %v84, %v223
    %vm340 = vcmp.eq.s32.totalorder %v85, %v220
    %vm341 = vcmp.eq.s32.totalorder %v85, %v221
    %vm342 = vcmp.eq.s32.totalorder %v85, %v222
    %vm343 = vcmp.eq.s32.totalorder %v85, %v223
    %vm344 = vcmp.eq.s32.totalorder %v86, %v220
    %vm345 = vcmp.eq.s32.totalorder %v86, %v221
    %vm346 = vcmp.eq.s32.totalorder %v86, %v222
    %vm347 = vcmp.eq.s32.totalorder %v86, %v223
    %vm348 = vcmp.eq.s32.totalorder %v87, %v220
    %vm349 = vcmp.eq.s32.totalorder %v87, %v221
    %vm350 = vcmp.eq.s32.totalorder %v87, %v222
    %vm351 = vcmp.eq.s32.totalorder %v87, %v223
    %vm352 = vmor %vm92, %vm224
    %vm353 = vmor %vm93, %vm225
    %vm354 = vmor %vm94, %vm226
    %vm355 = vmor %vm95, %vm227
    %vm356 = vmor %vm96, %vm228
    %vm357 = vmor %vm97, %vm229
    %vm358 = vmor %vm98, %vm230
    %vm359 = vmor %vm99, %vm231
    %vm360 = vmor %vm100, %vm232
    %vm361 = vmor %vm101, %vm233
    %vm362 = vmor %vm102, %vm234
    %vm363 = vmor %vm103, %vm235
    %vm364 = vmor %vm104, %vm236
    %vm365 = vmor %vm105, %vm237
    %vm366 = vmor %vm106, %vm238
    %vm367 = vmor %vm107, %vm239
    %vm368 = vmor %vm108, %vm240
    %vm369 = vmor %vm109, %vm241
    %vm370 = vmor %vm110, %vm242
    %vm371 = vmor %vm111, %vm243
    %vm372 = vmor %vm112, %vm244
    %vm373 = vmor %vm113, %vm245
    %vm374 = vmor %vm114, %vm246
    %vm375 = vmor %vm115, %vm247
    %vm376 = vmor %vm116, %vm248
    %vm377 = vmor %vm117, %vm249
    %vm378 = vmor %vm118, %vm250
    %vm379 = vmor %vm119, %vm251
    %vm380 = vmor %vm120, %vm252
    %vm381 = vmor %vm121, %vm253
    %vm382 = vmor %vm122, %vm254
    %vm383 = vmor %vm123, %vm255
    %vm384 = vmor %vm124, %vm256
    %vm385 = vmor %vm125, %vm257
    %vm386 = vmor %vm126, %vm258
    %vm387 = vmor %vm127, %vm259
    %vm388 = vmor %vm128, %vm260
    %vm389 = vmor %vm129, %vm261
    %vm390 = vmor %vm130, %vm262
    %vm391 = vmor %vm131, %vm263
    %vm392 = vmor %vm132, %vm264
    %vm393 = vmor %vm133, %vm265
    %vm394 = vmor %vm134, %vm266
    %vm395 = vmor %vm135, %vm267
    %vm396 = vmor %vm136, %vm268
    %vm397 = vmor %vm137, %vm269
    %vm398 = vmor %vm138, %vm270
    %vm399 = vmor %vm139, %vm271
    %vm400 = vmor %vm140, %vm272
    %vm401 = vmor %vm141, %vm273
    %vm402 = vmor %vm142, %vm274
    %vm403 = vmor %vm143, %vm275
    %vm404 = vmor %vm144, %vm276
    %vm405 = vmor %vm145, %vm277
    %vm406 = vmor %vm146, %vm278
    %vm407 = vmor %vm147, %vm279
    %vm408 = vmor %vm148, %vm280
    %vm409 = vmor %vm149, %vm281
    %vm410 = vmor %vm150, %vm282
    %vm411 = vmor %vm151, %vm283
    %vm412 = vmor %vm152, %vm284
    %vm413 = vmor %vm153, %vm285
    %vm414 = vmor %vm154, %vm286
    %vm415 = vmor %vm155, %vm287
    %vm416 = vmor %vm156, %vm288
    %vm417 = vmor %vm157, %vm289
    %vm418 = vmor %vm158, %vm290
    %vm419 = vmor %vm159, %vm291
    %vm420 = vmor %vm160, %vm292
    %vm421 = vmor %vm161, %vm293
    %vm422 = vmor %vm162, %vm294
    %vm423 = vmor %vm163, %vm295
    %vm424 = vmor %vm164, %vm296
    %vm425 = vmor %vm165, %vm297
    %vm426 = vmor %vm166, %vm298
    %vm427 = vmor %vm167, %vm299
    %vm428 = vmor %vm168, %vm300
    %vm429 = vmor %vm169, %vm301
    %vm430 = vmor %vm170, %vm302
    %vm431 = vmor %vm171, %vm303
    %vm432 = vmor %vm172, %vm304
    %vm433 = vmor %vm173, %vm305
    %vm434 = vmor %vm174, %vm306
    %vm435 = vmor %vm175, %vm307
    %vm436 = vmor %vm176, %vm308
    %vm437 = vmor %vm177, %vm309
    %vm438 = vmor %vm178, %vm310
    %vm439 = vmor %vm179, %vm311
    %vm440 = vmor %vm180, %vm312
    %vm441 = vmor %vm181, %vm313
    %vm442 = vmor %vm182, %vm314
    %vm443 = vmor %vm183, %vm315
    %vm444 = vmor %vm184, %vm316
    %vm445 = vmor %vm185, %vm317
    %vm446 = vmor %vm186, %vm318
    %vm447 = vmor %vm187, %vm319
    %vm448 = vmor %vm188, %vm320
    %vm449 = vmor %vm189, %vm321
    %vm450 = vmor %vm190, %vm322
    %vm451 = vmor %vm191, %vm323
    %vm452 = vmor %vm192, %vm324
    %vm453 = vmor %vm193, %vm325
    %vm454 = vmor %vm194, %vm326
    %vm455 = vmor %vm195, %vm327
    %vm456 = vmor %vm196, %vm328
    %vm457 = vmor %vm197, %vm329
    %vm458 = vmor %vm198, %vm330
    %vm459 = vmor %vm199, %vm331
    %vm460 = vmor %vm200, %vm332
    %vm461 = vmor %vm201, %vm333
    %vm462 = vmor %vm202, %vm334
    %vm463 = vmor %vm203, %vm335
    %vm464 = vmor %vm204, %vm336
    %vm465 = vmor %vm205, %vm337
    %vm466 = vmor %vm206, %vm338
    %vm467 = vmor %vm207, %vm339
    %vm468 = vmor %vm208, %vm340
    %vm469 = vmor %vm209, %vm341
    %vm470 = vmor %vm210, %vm342
    %vm471 = vmor %vm211, %vm343
    %vm472 = vmor %vm212, %vm344
    %vm473 = vmor %vm213, %vm345
    %vm474 = vmor %vm214, %vm346
    %vm475 = vmor %vm215, %vm347
    %vm476 = vmor %vm216, %vm348
    %vm477 = vmor %vm217, %vm349
    %vm478 = vmor %vm218, %vm350
    %vm479 = vmor %vm219, %vm351
    %v480 = vsel %vm352, 1, 0
    %v481 = vsel %vm353, 1, 0
    %v482 = vsel %vm354, 1, 0
    %v483 = vsel %vm355, 1, 0
    %v484 = vsel %vm356, 1, 0
    %v485 = vsel %vm357, 1, 0
    %v486 = vsel %vm358, 1, 0
    %v487 = vsel %vm359, 1, 0
    %v488 = vsel %vm360, 1, 0
    %v489 = vsel %vm361, 1, 0
    %v490 = vsel %vm362, 1, 0
    %v491 = vsel %vm363, 1, 0
    %v492 = vsel %vm364, 1, 0
    %v493 = vsel %vm365, 1, 0
    %v494 = vsel %vm366, 1, 0
    %v495 = vsel %vm367, 1, 0
    %v496 = vsel %vm368, 1, 0
    %v497 = vsel %vm369, 1, 0
    %v498 = vsel %vm370, 1, 0
    %v499 = vsel %vm371, 1, 0
    %v500 = vsel %vm372, 1, 0
    %v501 = vsel %vm373, 1, 0
    %v502 = vsel %vm374, 1, 0
    %v503 = vsel %vm375, 1, 0
    %v504 = vsel %vm376, 1, 0
    %v505 = vsel %vm377, 1, 0
    %v506 = vsel %vm378, 1, 0
    %v507 = vsel %vm379, 1, 0
    %v508 = vsel %vm380, 1, 0
    %v509 = vsel %vm381, 1, 0
    %v510 = vsel %vm382, 1, 0
    %v511 = vsel %vm383, 1, 0
    %v512 = vsel %vm384, 1, 0
    %v513 = vsel %vm385, 1, 0
    %v514 = vsel %vm386, 1, 0
    %v515 = vsel %vm387, 1, 0
    %v516 = vsel %vm388, 1, 0
    %v517 = vsel %vm389, 1, 0
    %v518 = vsel %vm390, 1, 0
    %v519 = vsel %vm391, 1, 0
    %v520 = vsel %vm392, 1, 0
    %v521 = vsel %vm393, 1, 0
    %v522 = vsel %vm394, 1, 0
    %v523 = vsel %vm395, 1, 0
    %v524 = vsel %vm396, 1, 0
    %v525 = vsel %vm397, 1, 0
    %v526 = vsel %vm398, 1, 0
    %v527 = vsel %vm399, 1, 0
    %v528 = vsel %vm400, 1, 0
    %v529 = vsel %vm401, 1, 0
    %v530 = vsel %vm402, 1, 0
    %v531 = vsel %vm403, 1, 0
    %v532 = vsel %vm404, 1, 0
    %v533 = vsel %vm405, 1, 0
    %v534 = vsel %vm406, 1, 0
    %v535 = vsel %vm407, 1, 0
    %v536 = vsel %vm408, 1, 0
    %v537 = vsel %vm409, 1, 0
    %v538 = vsel %vm410, 1, 0
    %v539 = vsel %vm411, 1, 0
    %v540 = vsel %vm412, 1, 0
    %v541 = vsel %vm413, 1, 0
    %v542 = vsel %vm414, 1, 0
    %v543 = vsel %vm415, 1, 0
    %v544 = vsel %vm416, 1, 0
    %v545 = vsel %vm417, 1, 0
    %v546 = vsel %vm418, 1, 0
    %v547 = vsel %vm419, 1, 0
    %v548 = vsel %vm420, 1, 0
    %v549 = vsel %vm421, 1, 0
    %v550 = vsel %vm422, 1, 0
    %v551 = vsel %vm423, 1, 0
    %v552 = vsel %vm424, 1, 0
    %v553 = vsel %vm425, 1, 0
    %v554 = vsel %vm426, 1, 0
    %v555 = vsel %vm427, 1, 0
    %v556 = vsel %vm428, 1, 0
    %v557 = vsel %vm429, 1, 0
    %v558 = vsel %vm430, 1, 0
    %v559 = vsel %vm431, 1, 0
    %v560 = vsel %vm432, 1, 0
    %v561 = vsel %vm433, 1, 0
    %v562 = vsel %vm434, 1, 0
    %v563 = vsel %vm435, 1, 0
    %v564 = vsel %vm436, 1, 0
    %v565 = vsel %vm437, 1, 0
    %v566 = vsel %vm438, 1, 0
    %v567 = vsel %vm439, 1, 0
    %v568 = vsel %vm440, 1, 0
    %v569 = vsel %vm441, 1, 0
    %v570 = vsel %vm442, 1, 0
    %v571 = vsel %vm443, 1, 0
    %v572 = vsel %vm444, 1, 0
    %v573 = vsel %vm445, 1, 0
    %v574 = vsel %vm446, 1, 0
    %v575 = vsel %vm447, 1, 0
    %v576 = vsel %vm448, 1, 0
    %v577 = vsel %vm449, 1, 0
    %v578 = vsel %vm450, 1, 0
    %v579 = vsel %vm451, 1, 0
    %v580 = vsel %vm452, 1, 0
    %v581 = vsel %vm453, 1, 0
    %v582 = vsel %vm454, 1, 0
    %v583 = vsel %vm455, 1, 0
    %v584 = vsel %vm456, 1, 0
    %v585 = vsel %vm457, 1, 0
    %v586 = vsel %vm458, 1, 0
    %v587 = vsel %vm459, 1, 0
    %v588 = vsel %vm460, 1, 0
    %v589 = vsel %vm461, 1, 0
    %v590 = vsel %vm462, 1, 0
    %v591 = vsel %vm463, 1, 0
    %v592 = vsel %vm464, 1, 0
    %v593 = vsel %vm465, 1, 0
    %v594 = vsel %vm466, 1, 0
    %v595 = vsel %vm467, 1, 0
    %v596 = vsel %vm468, 1, 0
    %v597 = vsel %vm469, 1, 0
    %v598 = vsel %vm470, 1, 0
    %v599 = vsel %vm471, 1, 0
    %v600 = vsel %vm472, 1, 0
    %v601 = vsel %vm473, 1, 0
    %v602 = vsel %vm474, 1, 0
    %v603 = vsel %vm475, 1, 0
    %v604 = vsel %vm476, 1, 0
    %v605 = vsel %vm477, 1, 0
    %v606 = vsel %vm478, 1, 0
    %v607 = vsel %vm479, 1, 0
    %v608 = vcvt.s32.f32 %v480
    %v609 = vcvt.s32.f32 %v481
    %v610 = vcvt.s32.f32 %v482
    %v611 = vcvt.s32.f32 %v483
    %v612 = vcvt.s32.f32 %v484
    %v613 = vcvt.s32.f32 %v485
    %v614 = vcvt.s32.f32 %v486
    %v615 = vcvt.s32.f32 %v487
    %v616 = vcvt.s32.f32 %v488
    %v617 = vcvt.s32.f32 %v489
    %v618 = vcvt.s32.f32 %v490
    %v619 = vcvt.s32.f32 %v491
    %v620 = vcvt.s32.f32 %v492
    %v621 = vcvt.s32.f32 %v493
    %v622 = vcvt.s32.f32 %v494
    %v623 = vcvt.s32.f32 %v495
    %v624 = vcvt.s32.f32 %v496
    %v625 = vcvt.s32.f32 %v497
    %v626 = vcvt.s32.f32 %v498
    %v627 = vcvt.s32.f32 %v499
    %v628 = vcvt.s32.f32 %v500
    %v629 = vcvt.s32.f32 %v501
    %v630 = vcvt.s32.f32 %v502
    %v631 = vcvt.s32.f32 %v503
    %v632 = vcvt.s32.f32 %v504
    %v633 = vcvt.s32.f32 %v505
    %v634 = vcvt.s32.f32 %v506
    %v635 = vcvt.s32.f32 %v507
    %v636 = vcvt.s32.f32 %v508
    %v637 = vcvt.s32.f32 %v509
    %v638 = vcvt.s32.f32 %v510
    %v639 = vcvt.s32.f32 %v511
    %v640 = vcvt.s32.f32 %v512
    %v641 = vcvt.s32.f32 %v513
    %v642 = vcvt.s32.f32 %v514
    %v643 = vcvt.s32.f32 %v515
    %v644 = vcvt.s32.f32 %v516
    %v645 = vcvt.s32.f32 %v517
    %v646 = vcvt.s32.f32 %v518
    %v647 = vcvt.s32.f32 %v519
    %v648 = vcvt.s32.f32 %v520
    %v649 = vcvt.s32.f32 %v521
    %v650 = vcvt.s32.f32 %v522
    %v651 = vcvt.s32.f32 %v523
    %v652 = vcvt.s32.f32 %v524
    %v653 = vcvt.s32.f32 %v525
    %v654 = vcvt.s32.f32 %v526
    %v655 = vcvt.s32.f32 %v527
    %v656 = vcvt.s32.f32 %v528
    %v657 = vcvt.s32.f32 %v529
    %v658 = vcvt.s32.f32 %v530
    %v659 = vcvt.s32.f32 %v531
    %v660 = vcvt.s32.f32 %v532
    %v661 = vcvt.s32.f32 %v533
    %v662 = vcvt.s32.f32 %v534
    %v663 = vcvt.s32.f32 %v535
    %v664 = vcvt.s32.f32 %v536
    %v665 = vcvt.s32.f32 %v537
    %v666 = vcvt.s32.f32 %v538
    %v667 = vcvt.s32.f32 %v539
    %v668 = vcvt.s32.f32 %v540
    %v669 = vcvt.s32.f32 %v541
    %v670 = vcvt.s32.f32 %v542
    %v671 = vcvt.s32.f32 %v543
    %v672 = vcvt.s32.f32 %v544
    %v673 = vcvt.s32.f32 %v545
    %v674 = vcvt.s32.f32 %v546
    %v675 = vcvt.s32.f32 %v547
    %v676 = vcvt.s32.f32 %v548
    %v677 = vcvt.s32.f32 %v549
    %v678 = vcvt.s32.f32 %v550
    %v679 = vcvt.s32.f32 %v551
    %v680 = vcvt.s32.f32 %v552
    %v681 = vcvt.s32.f32 %v553
    %v682 = vcvt.s32.f32 %v554
    %v683 = vcvt.s32.f32 %v555
    %v684 = vcvt.s32.f32 %v556
    %v685 = vcvt.s32.f32 %v557
    %v686 = vcvt.s32.f32 %v558
    %v687 = vcvt.s32.f32 %v559
    %v688 = vcvt.s32.f32 %v560
    %v689 = vcvt.s32.f32 %v561
    %v690 = vcvt.s32.f32 %v562
    %v691 = vcvt.s32.f32 %v563
    %v692 = vcvt.s32.f32 %v564
    %v693 = vcvt.s32.f32 %v565
    %v694 = vcvt.s32.f32 %v566
    %v695 = vcvt.s32.f32 %v567
    %v696 = vcvt.s32.f32 %v568
    %v697 = vcvt.s32.f32 %v569
    %v698 = vcvt.s32.f32 %v570
    %v699 = vcvt.s32.f32 %v571
    %v700 = vcvt.s32.f32 %v572
    %v701 = vcvt.s32.f32 %v573
    %v702 = vcvt.s32.f32 %v574
    %v703 = vcvt.s32.f32 %v575
    %v704 = vcvt.s32.f32 %v576
    %v705 = vcvt.s32.f32 %v577
    %v706 = vcvt.s32.f32 %v578
    %v707 = vcvt.s32.f32 %v579
    %v708 = vcvt.s32.f32 %v580
    %v709 = vcvt.s32.f32 %v581
    %v710 = vcvt.s32.f32 %v582
    %v711 = vcvt.s32.f32 %v583
    %v712 = vcvt.s32.f32 %v584
    %v713 = vcvt.s32.f32 %v585
    %v714 = vcvt.s32.f32 %v586
    %v715 = vcvt.s32.f32 %v587
    %v716 = vcvt.s32.f32 %v588
    %v717 = vcvt.s32.f32 %v589
    %v718 = vcvt.s32.f32 %v590
    %v719 = vcvt.s32.f32 %v591
    %v720 = vcvt.s32.f32 %v592
    %v721 = vcvt.s32.f32 %v593
    %v722 = vcvt.s32.f32 %v594
    %v723 = vcvt.s32.f32 %v595
    %v724 = vcvt.s32.f32 %v596
    %v725 = vcvt.s32.f32 %v597
    %v726 = vcvt.s32.f32 %v598
    %v727 = vcvt.s32.f32 %v599
    %v728 = vcvt.s32.f32 %v600
    %v729 = vcvt.s32.f32 %v601
    %v730 = vcvt.s32.f32 %v602
    %v731 = vcvt.s32.f32 %v603
    %v732 = vcvt.s32.f32 %v604
    %v733 = vcvt.s32.f32 %v605
    %v734 = vcvt.s32.f32 %v606
    %v735 = vcvt.s32.f32 %v607
    %v736 = vld [vmem:[#allocation7] sm:$0xff]
    %v737 = vld [vmem:[#allocation7 + $0x8] sm:$0xff]
    %v738 = vld [vmem:[#allocation7 + $0x10] sm:$0xff]
    %v739 = vld [vmem:[#allocation7 + $0x18] sm:$0xff]
    %v740 = vld [vmem:[#allocation7 + $0x20] sm:$0xff]
    %v741 = vld [vmem:[#allocation7 + $0x28] sm:$0xff]
    %v742 = vld [vmem:[#allocation7 + $0x30] sm:$0xff]
    %v743 = vld [vmem:[#allocation7 + $0x38] sm:$0xff]
    %744 = vmatpush.msra.mxu0 %v668
    %745 = vmatpush.msra.mxu0 %v664
    %746 = vmatpush.msra.mxu0 %v660
    %747 = vmatpush.msra.mxu0 %v656
    %748 = vmatpush.msra.mxu0 %v652
    %749 = vmatpush.msra.mxu0 %v648
    %750 = vmatpush.msra.mxu0 %v644
    %751 = vmatpush.msra.mxu0 %v640
    %752 = vmatpush.msra.mxu0 %v636
    %753 = vmatpush.msra.mxu0 %v632
    %754 = vmatpush.msra.mxu0 %v628
    %755 = vmatpush.msra.mxu0 %v624
    %756 = vmatpush.msra.mxu0 %v620
    %757 = vmatpush.msra.mxu0 %v616
    %758 = vmatpush.msra.mxu0 %v612
    %759 = vmatpush.msra.mxu0 %v608
    %760 = vmatmul.f32.gmra.mxu0 %v736
    %v761 = vpop.f32.mrf.mxu0
    %v762 = vadd.f32 0.0, %v761
    %763 = vmatmul.f32.gmra.mxu0 %v738
    %v764 = vpop.f32.mrf.mxu0
    %v765 = vadd.f32 0.0, %v764
    %766 = vmatmul.f32.gmra.mxu0 %v740
    %v767 = vpop.f32.mrf.mxu0
    %v768 = vadd.f32 0.0, %v767
    %769 = vmatmul.f32.gmra.mxu0 %v742
    %v770 = vpop.f32.mrf.mxu0
    %v771 = vadd.f32 0.0, %v770
    %772 = vdwg.mxu0
    %773 = vmatpush.msra.mxu0 %v732
    %774 = vmatpush.msra.mxu0 %v728
    %775 = vmatpush.msra.mxu0 %v724
    %776 = vmatpush.msra.mxu0 %v720
    %777 = vmatpush.msra.mxu0 %v716
    %778 = vmatpush.msra.mxu0 %v712
    %779 = vmatpush.msra.mxu0 %v708
    %780 = vmatpush.msra.mxu0 %v704
    %781 = vmatpush.msra.mxu0 %v700
    %782 = vmatpush.msra.mxu0 %v696
    %783 = vmatpush.msra.mxu0 %v692
    %784 = vmatpush.msra.mxu0 %v688
    %785 = vmatpush.msra.mxu0 %v684
    %786 = vmatpush.msra.mxu0 %v680
    %787 = vmatpush.msra.mxu0 %v676
    %788 = vmatpush.msra.mxu0 %v672
    %789 = vmatmul.f32.gmra.mxu0 %v737
    %v790 = vpop.f32.mrf.mxu0
    %v791 = vadd.f32 %v762, %v790
    %792 = vmatmul.f32.gmra.mxu0 %v739
    %v793 = vpop.f32.mrf.mxu0
    %v794 = vadd.f32 %v765, %v793
    %795 = vmatmul.f32.gmra.mxu0 %v741
    %v796 = vpop.f32.mrf.mxu0
    %v797 = vadd.f32 %v768, %v796
    %798 = vmatmul.f32.gmra.mxu0 %v743
    %v799 = vpop.f32.mrf.mxu0
    %v800 = vadd.f32 %v771, %v799
    %801 = vdwg.mxu0
    %802 = vmatpush.msra.mxu0 %v669
    %803 = vmatpush.msra.mxu0 %v665
    %804 = vmatpush.msra.mxu0 %v661
    %805 = vmatpush.msra.mxu0 %v657
    %806 = vmatpush.msra.mxu0 %v653
    %807 = vmatpush.msra.mxu0 %v649
    %808 = vmatpush.msra.mxu0 %v645
    %809 = vmatpush.msra.mxu0 %v641
    %810 = vmatpush.msra.mxu0 %v637
    %811 = vmatpush.msra.mxu0 %v633
    %812 = vmatpush.msra.mxu0 %v629
    %813 = vmatpush.msra.mxu0 %v625
    %814 = vmatpush.msra.mxu0 %v621
    %815 = vmatpush.msra.mxu0 %v617
    %816 = vmatpush.msra.mxu0 %v613
    %817 = vmatpush.msra.mxu0 %v609
    %818 = vmatmul.f32.gmra.mxu0 %v736
    %v819 = vpop.f32.mrf.mxu0
    %v820 = vadd.f32 0.0, %v819
    %821 = vmatmul.f32.gmra.mxu0 %v738
    %v822 = vpop.f32.mrf.mxu0
    %v823 = vadd.f32 0.0, %v822
    %824 = vmatmul.f32.gmra.mxu0 %v740
    %v825 = vpop.f32.mrf.mxu0
    %v826 = vadd.f32 0.0, %v825
    %827 = vmatmul.f32.gmra.mxu0 %v742
    %v828 = vpop.f32.mrf.mxu0
    %v829 = vadd.f32 0.0, %v828
    %830 = vdwg.mxu0
    %831 = vmatpush.msra.mxu0 %v733
    %832 = vmatpush.msra.mxu0 %v729
    %833 = vmatpush.msra.mxu0 %v725
    %834 = vmatpush.msra.mxu0 %v721
    %835 = vmatpush.msra.mxu0 %v717
    %836 = vmatpush.msra.mxu0 %v713
    %837 = vmatpush.msra.mxu0 %v709
    %838 = vmatpush.msra.mxu0 %v705
    %839 = vmatpush.msra.mxu0 %v701
    %840 = vmatpush.msra.mxu0 %v697
    %841 = vmatpush.msra.mxu0 %v693
    %842 = vmatpush.msra.mxu0 %v689
    %843 = vmatpush.msra.mxu0 %v685
    %844 = vmatpush.msra.mxu0 %v681
    %845 = vmatpush.msra.mxu0 %v677
    %846 = vmatpush.msra.mxu0 %v673
    %847 = vmatmul.f32.gmra.mxu0 %v737
    %v848 = vpop.f32.mrf.mxu0
    %v849 = vadd.f32 %v820, %v848
    %850 = vmatmul.f32.gmra.mxu0 %v739
    %v851 = vpop.f32.mrf.mxu0
    %v852 = vadd.f32 %v823, %v851
    %853 = vmatmul.f32.gmra.mxu0 %v741
    %v854 = vpop.f32.mrf.mxu0
    %v855 = vadd.f32 %v826, %v854
    %856 = vmatmul.f32.gmra.mxu0 %v743
    %v857 = vpop.f32.mrf.mxu0
    %v858 = vadd.f32 %v829, %v857
    %859 = vdwg.mxu0
    %860 = vmatpush.msra.mxu0 %v670
    %861 = vmatpush.msra.mxu0 %v666
    %862 = vmatpush.msra.mxu0 %v662
    %863 = vmatpush.msra.mxu0 %v658
    %864 = vmatpush.msra.mxu0 %v654
    %865 = vmatpush.msra.mxu0 %v650
    %866 = vmatpush.msra.mxu0 %v646
    %867 = vmatpush.msra.mxu0 %v642
    %868 = vmatpush.msra.mxu0 %v638
    %869 = vmatpush.msra.mxu0 %v634
    %870 = vmatpush.msra.mxu0 %v630
    %871 = vmatpush.msra.mxu0 %v626
    %872 = vmatpush.msra.mxu0 %v622
    %873 = vmatpush.msra.mxu0 %v618
    %874 = vmatpush.msra.mxu0 %v614
    %875 = vmatpush.msra.mxu0 %v610
    %876 = vmatmul.f32.gmra.mxu0 %v736
    %v877 = vpop.f32.mrf.mxu0
    %v878 = vadd.f32 0.0, %v877
    %879 = vmatmul.f32.gmra.mxu0 %v738
    %v880 = vpop.f32.mrf.mxu0
    %v881 = vadd.f32 0.0, %v880
    %882 = vmatmul.f32.gmra.mxu0 %v740
    %v883 = vpop.f32.mrf.mxu0
    %v884 = vadd.f32 0.0, %v883
    %885 = vmatmul.f32.gmra.mxu0 %v742
    %v886 = vpop.f32.mrf.mxu0
    %v887 = vadd.f32 0.0, %v886
    %888 = vdwg.mxu0
    %889 = vmatpush.msra.mxu0 %v734
    %890 = vmatpush.msra.mxu0 %v730
    %891 = vmatpush.msra.mxu0 %v726
    %892 = vmatpush.msra.mxu0 %v722
    %893 = vmatpush.msra.mxu0 %v718
    %894 = vmatpush.msra.mxu0 %v714
    %895 = vmatpush.msra.mxu0 %v710
    %896 = vmatpush.msra.mxu0 %v706
    %897 = vmatpush.msra.mxu0 %v702
    %898 = vmatpush.msra.mxu0 %v698
    %899 = vmatpush.msra.mxu0 %v694
    %900 = vmatpush.msra.mxu0 %v690
    %901 = vmatpush.msra.mxu0 %v686
    %902 = vmatpush.msra.mxu0 %v682
    %903 = vmatpush.msra.mxu0 %v678
    %904 = vmatpush.msra.mxu0 %v674
    %905 = vmatmul.f32.gmra.mxu0 %v737
    %v906 = vpop.f32.mrf.mxu0
    %v907 = vadd.f32 %v878, %v906
    %908 = vmatmul.f32.gmra.mxu0 %v739
    %v909 = vpop.f32.mrf.mxu0
    %v910 = vadd.f32 %v881, %v909
    %911 = vmatmul.f32.gmra.mxu0 %v741
    %v912 = vpop.f32.mrf.mxu0
    %v913 = vadd.f32 %v884, %v912
    %914 = vmatmul.f32.gmra.mxu0 %v743
    %v915 = vpop.f32.mrf.mxu0
    %v916 = vadd.f32 %v887, %v915
    %917 = vdwg.mxu0
    %918 = vmatpush.msra.mxu0 %v671
    %919 = vmatpush.msra.mxu0 %v667
    %920 = vmatpush.msra.mxu0 %v663
    %921 = vmatpush.msra.mxu0 %v659
    %922 = vmatpush.msra.mxu0 %v655
    %923 = vmatpush.msra.mxu0 %v651
    %924 = vmatpush.msra.mxu0 %v647
    %925 = vmatpush.msra.mxu0 %v643
    %926 = vmatpush.msra.mxu0 %v639
    %927 = vmatpush.msra.mxu0 %v635
    %928 = vmatpush.msra.mxu0 %v631
    %929 = vmatpush.msra.mxu0 %v627
    %930 = vmatpush.msra.mxu0 %v623
    %931 = vmatpush.msra.mxu0 %v619
    %932 = vmatpush.msra.mxu0 %v615
    %933 = vmatpush.msra.mxu0 %v611
    %934 = vmatmul.f32.gmra.mxu0 %v736
    %v935 = vpop.f32.mrf.mxu0
    %v936 = vadd.f32 0.0, %v935
    %937 = vmatmul.f32.gmra.mxu0 %v738
    %v938 = vpop.f32.mrf.mxu0
    %v939 = vadd.f32 0.0, %v938
    %940 = vmatmul.f32.gmra.mxu0 %v740
    %v941 = vpop.f32.mrf.mxu0
    %v942 = vadd.f32 0.0, %v941
    %943 = vmatmul.f32.gmra.mxu0 %v742
    %v944 = vpop.f32.mrf.mxu0
    %v945 = vadd.f32 0.0, %v944
    %946 = vdwg.mxu0
    %947 = vmatpush.msra.mxu0 %v735
    %948 = vmatpush.msra.mxu0 %v731
    %949 = vmatpush.msra.mxu0 %v727
    %950 = vmatpush.msra.mxu0 %v723
    %951 = vmatpush.msra.mxu0 %v719
    %952 = vmatpush.msra.mxu0 %v715
    %953 = vmatpush.msra.mxu0 %v711
    %954 = vmatpush.msra.mxu0 %v707
    %955 = vmatpush.msra.mxu0 %v703
    %956 = vmatpush.msra.mxu0 %v699
    %957 = vmatpush.msra.mxu0 %v695
    %958 = vmatpush.msra.mxu0 %v691
    %959 = vmatpush.msra.mxu0 %v687
    %960 = vmatpush.msra.mxu0 %v683
    %961 = vmatpush.msra.mxu0 %v679
    %962 = vmatpush.msra.mxu0 %v675
    %963 = vmatmul.f32.gmra.mxu0 %v737
    %v964 = vpop.f32.mrf.mxu0
    %v965 = vadd.f32 %v936, %v964
    %966 = vmatmul.f32.gmra.mxu0 %v739
    %v967 = vpop.f32.mrf.mxu0
    %v968 = vadd.f32 %v939, %v967
    %969 = vmatmul.f32.gmra.mxu0 %v741
    %v970 = vpop.f32.mrf.mxu0
    %v971 = vadd.f32 %v942, %v970
    %972 = vmatmul.f32.gmra.mxu0 %v743
    %v973 = vpop.f32.mrf.mxu0
    %v974 = vadd.f32 %v945, %v973
    %975 = vdwg.mxu0
    %v976 = vmul.f32 %v791, %v791
    %v977 = vmul.f32 %v849, %v849
    %v978 = vmul.f32 %v907, %v907
    %v979 = vmul.f32 %v965, %v965
    %v980 = vmul.f32 %v794, %v794
    %v981 = vmul.f32 %v852, %v852
    %v982 = vmul.f32 %v910, %v910
    %v983 = vmul.f32 %v968, %v968
    %v984 = vmul.f32 %v797, %v797
    %v985 = vmul.f32 %v855, %v855
    %v986 = vmul.f32 %v913, %v913
    %v987 = vmul.f32 %v971, %v971
    %v988 = vmul.f32 %v800, %v800
    %v989 = vmul.f32 %v858, %v858
    %v990 = vmul.f32 %v916, %v916
    %v991 = vmul.f32 %v974, %v974
    %v992 = vadd.f32 %v976, %v980
    %v993 = vadd.f32 %v992, %v984
    %v994 = vadd.f32 %v993, %v988
    %v995 = vrot.slane %v994, 4
    %v996 = vadd.f32 %v994, %v995
    %v997 = vrot.slane %v996, 2
    %v998 = vadd.f32 %v996, %v997
    %v999 = vrot.slane %v998, 1
    %v1000 = vadd.f32 %v998, %v999
    %v1001 = vadd.f32 %v977, %v981
    %v1002 = vadd.f32 %v1001, %v985
    %v1003 = vadd.f32 %v1002, %v989
    %v1004 = vrot.slane %v1003, 4
    %v1005 = vadd.f32 %v1003, %v1004
    %v1006 = vrot.slane %v1005, 2
    %v1007 = vadd.f32 %v1005, %v1006
    %v1008 = vrot.slane %v1007, 1
    %v1009 = vadd.f32 %v1007, %v1008
    %v1010 = vadd.f32 %v978, %v982
    %v1011 = vadd.f32 %v1010, %v986
    %v1012 = vadd.f32 %v1011, %v990
    %v1013 = vrot.slane %v1012, 4
    %v1014 = vadd.f32 %v1012, %v1013
    %v1015 = vrot.slane %v1014, 2
    %v1016 = vadd.f32 %v1014, %v1015
    %v1017 = vrot.slane %v1016, 1
    %v1018 = vadd.f32 %v1016, %v1017
    %v1019 = vadd.f32 %v979, %v983
    %v1020 = vadd.f32 %v1019, %v987
    %v1021 = vadd.f32 %v1020, %v991
    %v1022 = vrot.slane %v1021, 4
    %v1023 = vadd.f32 %v1021, %v1022
    %v1024 = vrot.slane %v1023, 2
    %v1025 = vadd.f32 %v1023, %v1024
    %v1026 = vrot.slane %v1025, 1
    %v1027 = vadd.f32 %v1025, %v1026
    %v1028 = vrsqrt.pop %v1000
    %v1029 = vmul.f32 %v1028, %v1000
    %v1030 = vmul.f32 %v1029, %v1028
    %v1031 = vmul.f32 0.5, %v1030
    %v1032 = vsub.f32 1.5, %v1031
    %v1033 = vmul.f32 %v1028, %v1032
    %v1034 = vmul.f32 %v1000, %v1033
    %vm1035 = vcmp.eq.f32.partialorder %v1000, inf
    %v1036 = vsel %vm1035, %v1000, %v1034
    %vm1037 = vcmp.eq.f32.partialorder %v1000, 0.0
    %v1038 = vand.u32 %v1000, 2147483648
    %v1039 = vsel %vm1037, %v1038, %v1036
    %v1040 = vrsqrt.pop %v1009
    %v1041 = vmul.f32 %v1040, %v1009
    %v1042 = vmul.f32 %v1041, %v1040
    %v1043 = vmul.f32 0.5, %v1042
    %v1044 = vsub.f32 1.5, %v1043
    %v1045 = vmul.f32 %v1040, %v1044
    %v1046 = vmul.f32 %v1009, %v1045
    %vm1047 = vcmp.eq.f32.partialorder %v1009, inf
    %v1048 = vsel %vm1047, %v1009, %v1046
    %vm1049 = vcmp.eq.f32.partialorder %v1009, 0.0
    %v1050 = vand.u32 %v1009, 2147483648
    %v1051 = vsel %vm1049, %v1050, %v1048
    %v1052 = vrsqrt.pop %v1018
    %v1053 = vmul.f32 %v1052, %v1018
    %v1054 = vmul.f32 %v1053, %v1052
    %v1055 = vmul.f32 0.5, %v1054
    %v1056 = vsub.f32 1.5, %v1055
    %v1057 = vmul.f32 %v1052, %v1056
    %v1058 = vmul.f32 %v1018, %v1057
    %vm1059 = vcmp.eq.f32.partialorder %v1018, inf
    %v1060 = vsel %vm1059, %v1018, %v1058
    %vm1061 = vcmp.eq.f32.partialorder %v1018, 0.0
    %v1062 = vand.u32 %v1018, 2147483648
    %v1063 = vsel %vm1061, %v1062, %v1060
    %v1064 = vrsqrt.pop %v1027
    %v1065 = vmul.f32 %v1064, %v1027
    %v1066 = vmul.f32 %v1065, %v1064
    %v1067 = vmul.f32 0.5, %v1066
    %v1068 = vsub.f32 1.5, %v1067
    %v1069 = vmul.f32 %v1064, %v1068
    %v1070 = vmul.f32 %v1027, %v1069
    %vm1071 = vcmp.eq.f32.partialorder %v1027, inf
    %v1072 = vsel %vm1071, %v1027, %v1070
    %vm1073 = vcmp.eq.f32.partialorder %v1027, 0.0
    %v1074 = vand.u32 %v1027, 2147483648
    %v1075 = vsel %vm1073, %v1074, %v1072
    %s1076 = sld [smem:[#allocation2]]
    %v1077 = vstv %s1076
    %v1078 = vmul.f32 %v1039, %v1077
    %v1079 = vmul.f32 %v1051, %v1077
    %v1080 = vmul.f32 %v1063, %v1077
    %v1081 = vmul.f32 %v1075, %v1077
    %s1082 = sld [smem:[#allocation3]]
    %v1083 = vstv %s1082
    %v1084 = vadd.f32 %v1078, %v1083
    %v1085 = vadd.f32 %v1079, %v1083
    %v1086 = vadd.f32 %v1080, %v1083
    %v1087 = vadd.f32 %v1081, %v1083
    %v1092 = vrot.slane %v1085, 7
    %v1093 = vrot.slane %v1086, 6
    %v1094 = vrot.slane %v1087, 5
    %vm1095 = vcmask 1040384
    %v1096 = vsel %vm1095, %v1084, %v1092
    %vm1097 = vcmask 1042434
    %v1098 = vsel %vm1097, %v1093, %v1094
    %vm1099 = vcmask 1041408
    %v1100 = vsel %vm1099, %v1096, %v1098
    %v1102 = vlaneseq
    %vm1103 = vcmp.ge.s32.totalorder %v1102, 0
    %vm1104 = vcmp.lt.s32.totalorder %v1102, 512
    %vm1105 = vmand %vm1103, %vm1104
    %1106 = vst.msk [vmem:[#allocation9] sm:$0xf] %vm1105, %v1100
    // Predicated region
    $region30: #{tpu_custom_call.1} parent=1 // pred_check
      _
    $region31: #{tpu_custom_call.1} parent=1 // pred_check_branch
      %1108 = sbr.rel (0) target = $region33
    $region32: #{tpu_custom_call.1} parent=1 // pred_region
      %1110 = vsyncadd [#allocation6], 0
      %s1112 = sshll.u32 [#allocation9], 4
      %s1113 = int_to_ptr.vmem [resolvable:$true] %s1112
      %s1114 = sshll.u32 %s5, 4
      %s1115 = int_to_ptr.hbm [resolvable:$true] %s1114
      %1117 = dma.vmem_to_hbm [thread:$0]  %s1113, 64, %s1115, [#allocation6]
    $region33: #{tpu_custom_call.1} parent=1 // pred_fallthru
      _
    // Predicated region
    $region34: #{tpu_custom_call.1} parent=1 // pred_check
      _
    $region35: #{tpu_custom_call.1} parent=1 // pred_check_branch
      %1119 = sbr.rel (0) target = $region37
    $region36: #{tpu_custom_call.1} parent=1 // pred_region
      %1121 = dma.done [#allocation6], 64
    $region37: #{tpu_custom_call.1} parent=1 // pred_fallthru
      _
    %1122 = vsyncpa [#allocation5], 1
    %1123 = vsyncpa [#allocation8], 1
    %1124 = vsyncpa [#allocation6], 1

</llo_original>
